<compile_context>
chip_gen: v7x
topology: tpu7x:2x2x1
jax: 0.10.0
libtpu: 0.0.40
codegen_flags: <defaults>
</compile_context>

<pallas_src>
import jax
import jax.numpy as jnp
from jax.experimental import pallas as pl
from jax.experimental.pallas import tpu as pltpu

# ----------------------- small config (synthetic) -----------------------
B = 2            # batch
S = 8            # context length
D = 32           # embedding_dim
V = 64           # vocab_size
NUM_BLOCKS = 2
NH = 4           # mLSTM heads
INNER = 2 * D    # proj_factor = 2.0  -> 64
DH = INNER // NH # 16
CONV_K = 4       # conv1d_kernel_size
QKV_BS = 4       # qkv_proj_blocksize (LinearHeadwiseExpand -> block-diag weight)

LN_EPS = 1e-5
GN_EPS = 1e-5
CELL_EPS = 1e-6


def _ln(x, w, eps):
    mu = jnp.mean(x, axis=-1, keepdims=True)
    var = jnp.mean((x - mu) ** 2, axis=-1, keepdims=True)
    return (x - mu) * jax.lax.rsqrt(var + eps) * w


# -------------------- fused xLSTM block-stack kernel ---------------------
def _xlstm_stack_kernel(x_ref, lnw_ref, upw_ref, convw_ref, convb_ref,
                        qkgw_ref, vgw_ref, gb_ref, gnw_ref, skip_ref,
                        downw_ref, o_ref, resid_sc, ltri_sc):
    l = pl.program_id(1)                     # block index (sequential, "arbitrary")

    # Start of a new batch element: load the residual stream from HBM and
    # (re)build the tiny (S,S) lower-triangular mask once; both persist in
    # VMEM scratch across the whole per-batch block loop.
    @pl.when(l == 0)
    def _():
        row = jax.lax.broadcasted_iota(jnp.int32, (S, S), 0)
        col = jax.lax.broadcasted_iota(jnp.int32, (S, S), 1)
        ltri_sc[...] = (row >= col).astype(jnp.float32)
        resid_sc[...] = x_ref[0]

    x = resid_sc[...]                        # (S, D) residual stream
    ltri = ltri_sc[...]                      # (S, S) float lower-tri (incl. diag)

    # 1) pre-norm
    xn = _ln(x, lnw_ref[0], LN_EPS)

    # 2) up-projection -> [x_mlstm | z]   (bf16 operands, f32 accumulate)
    xi = jnp.dot(xn.astype(jnp.bfloat16), upw_ref[0],
                 preferred_element_type=jnp.float32)          # (S, 2*INNER)
    x_mlstm = xi[:, :INNER]
    z = xi[:, INNER:]

    # 3) depthwise causal conv1d (k=CONV_K) + SiLU — pure VPU work:
    #    shifted copies with zero prefix, no MXU shift-matmuls, no (S,S) masks.
    w = convw_ref[0]                          # (K, INNER)
    conv_pre = x_mlstm * w[CONV_K - 1:CONV_K, :]
    for kk in range(CONV_K - 1):
        shift = CONV_K - 1 - kk
        shifted = jnp.concatenate(
            [jnp.zeros((shift, INNER), jnp.float32), x_mlstm[:S - shift, :]],
            axis=0)                           # x[t-shift], zero for t < shift
        conv_pre = conv_pre + shifted * w[kk:kk + 1, :]
    conv_pre = conv_pre + convb_ref[0]
    conv_act = conv_pre * jax.nn.sigmoid(conv_pre)            # SiLU, (S, INNER)

    # 4) q,k and their gate contribution in ONE matmul; v and its gate
    #    contribution in a second (gate weights pre-folded at init).
    qkg = jnp.dot(conv_act.astype(jnp.bfloat16), qkgw_ref[0],
                  preferred_element_type=jnp.float32)          # (S, 2*INNER+2*NH)
    q = qkg[:, :INNER]
    k = qkg[:, INNER:2 * INNER]
    vg = jnp.dot(x_mlstm.astype(jnp.bfloat16), vgw_ref[0],
                 preferred_element_type=jnp.float32)           # (S, INNER+2*NH)
    v = vg[:, :INNER]
    gates = qkg[:, 2 * INNER:] + vg[:, INNER:] + gb_ref[0]     # (S, 2*NH): [i | f]

    # cumulative log forget gates for ALL heads: one O(S^2) matmul + transpose
    logf = jax.nn.log_sigmoid(gates[:, NH:])                               # (S, NH)
    cum_cols = jnp.dot(ltri, logf, preferred_element_type=jnp.float32)     # (S, NH)
    cum_rows = cum_cols.T                                                  # (NH, S)
    ig_rows = gates[:, :NH].T                                              # (NH, S)

    zs = z * jax.nn.sigmoid(z)                # output gate SiLU(z)
    inv_sqrt_dh = 1.0 / (DH ** 0.5)
    gnw = gnw_ref[0]

    h_heads = []
    for h in range(NH):                       # all heads of this batch in one tile
        lo = h * DH
        q_h = q[:, lo:lo + DH]
        k_h = k[:, lo:lo + DH]
        v_h = v[:, lo:lo + DH]

        # stabilized decay matrix D
        cum_col = cum_cols[:, h:h + 1]        # (S, 1)   cum[i]
        cum_row = cum_rows[h:h + 1, :]        # (1, S)   cum[j]
        ig_row = ig_rows[h:h + 1, :]          # (1, S)
        log_fg_mat = jnp.where(ltri > 0.0, cum_col - cum_row, -jnp.inf)
        log_D = log_fg_mat + ig_row
        max_log_D = jnp.max(log_D, axis=-1, keepdims=True)
        Dm = jnp.exp(log_D - max_log_D)

        # q_h @ k_h^T via dot_general (no explicit transpose), bf16 operands
        qk_h = jax.lax.dot_general(
            q_h.astype(jnp.bfloat16), k_h.astype(jnp.bfloat16),
            (((1,), (1,)), ((), ())),
            preferred_element_type=jnp.float32) * inv_sqrt_dh
        Cm = qk_h * Dm
        normalizer = jnp.maximum(jnp.abs(jnp.sum(Cm, axis=-1, keepdims=True)),
                                 jnp.exp(-max_log_D))
        Cn = Cm * pl.reciprocal(normalizer + CELL_EPS, approx=False)
        h_h = jnp.dot(Cn.astype(jnp.bfloat16), v_h.astype(jnp.bfloat16),
                      preferred_element_type=jnp.float32)      # (S, DH)

        # per-head group norm (weight only)
        h_heads.append(_ln(h_h, gnw[:, lo:lo + DH], GN_EPS))

    # output gate + learnable skip over the full width, then ONE proj_down
    h_norm = jnp.concatenate(h_heads, axis=-1)                 # (S, INNER)
    gated = (h_norm + skip_ref[0] * conv_act) * zs             # (S, INNER)
    y = jnp.dot(gated.astype(jnp.bfloat16), downw_ref[0],
                preferred_element_type=jnp.float32)            # (S, D)

    new_resid = x + y
    resid_sc[...] = new_resid                                  # carry to next block

    @pl.when(l == pl.num_programs(1) - 1)
    def _():
        o_ref[0] = new_resid                  # write residual stream once per batch


def _final_kernel(x_ref, lnw_ref, headw_ref, o_ref):
    xn = _ln(x_ref[...], lnw_ref[...], LN_EPS)
    o_ref[...] = jnp.dot(xn.astype(jnp.bfloat16), headw_ref[...],
                         preferred_element_type=jnp.float32)


# --------------------------- kernel wrappers -----------------------------
def xlstm_stack(x, p):
    Bb, Ss, Dd = x.shape

    def wspec(shape):
        return pl.BlockSpec((1,) + shape, lambda b, l: (l, 0, 0))

    return pl.pallas_call(
        _xlstm_stack_kernel,
        out_shape=jax.ShapeDtypeStruct((Bb, Ss, Dd), jnp.float32),
        grid=(Bb, NUM_BLOCKS),
        in_specs=[
            pl.BlockSpec((1, Ss, Dd), lambda b, l: (b, 0, 0)),   # x (read at l==0)
            wspec((1, Dd)),                                       # ln_w
            wspec((Dd, 2 * INNER)),                               # proj_up (bf16)
            wspec((CONV_K, INNER)),                               # conv taps
            wspec((1, INNER)),                                    # conv bias
            wspec((INNER, 2 * INNER + 2 * NH)),                   # q|k|gate (bf16)
            wspec((INNER, INNER + 2 * NH)),                       # v|gate  (bf16)
            wspec((1, 2 * NH)),                                   # gate bias
            wspec((1, INNER)),                                    # group-norm weight
            wspec((1, INNER)),                                    # learnable skip
            wspec((INNER, Dd)),                                   # proj_down (bf16)
        ],
        out_specs=pl.BlockSpec((1, Ss, Dd), lambda b, l: (b, 0, 0)),
        scratch_shapes=[pltpu.VMEM((Ss, Dd), jnp.float32),        # residual carry
                        pltpu.VMEM((Ss, Ss), jnp.float32)],       # lower-tri mask
        compiler_params=pltpu.CompilerParams(
            dimension_semantics=("parallel", "arbitrary")),
    )(x, p["ln_w"], p["up_wt"], p["conv_w"], p["conv_b"], p["qkg_wt"],
      p["vg_wt"], p["gate_b"], p["gn_w"], p["skip"], p["down_wt"])


def final_norm_head(x, post_w, head_wt):
    Bb, Ss, Dd = x.shape
    M = Bb * Ss
    TM = 8
    # TODO(synk): at realistic vocab sizes tile V (128-multiple lane-dense
    # slabs) and stream the head weight; unnecessary at V=64.
    logits = pl.pallas_call(
        _final_kernel,
        out_shape=jax.ShapeDtypeStruct((M, V), jnp.float32),
        grid=(M // TM,),
        in_specs=[pl.BlockSpec((TM, Dd), lambda i: (i, 0)),
                  pl.BlockSpec((1, Dd), lambda i: (0, 0)),
                  pl.BlockSpec((Dd, V), lambda i: (0, 0))],
        out_specs=pl.BlockSpec((TM, V), lambda i: (i, 0)),
        compiler_params=pltpu.CompilerParams(dimension_semantics=("parallel",)),
    )(x.reshape(M, Dd), post_w, head_wt)
    return logits.reshape(Bb, Ss, V)


# --------------------------- parameters ----------------------------------
def _block_diag_weight(key, dim, bs):
    # LinearHeadwiseExpand: block-diagonal weight.
    nb = dim // bs
    blocks = jax.random.normal(key, (nb, bs, bs)) * (2.0 / (bs + bs)) ** 0.5
    w = jnp.zeros((dim, dim))
    for i in range(nb):
        w = w.at[i * bs:(i + 1) * bs, i * bs:(i + 1) * bs].set(blocks[i])
    return w


def init_params(key):
    """PyTorch-layout init, then pre-transposed / pre-fused / pre-cast (bf16)
    and stacked along a leading NUM_BLOCKS axis for the fused stack kernel."""
    ks = jax.random.split(key, 3 + NUM_BLOCKS)
    small = (2.0 / (5 * D)) ** 0.5
    per_block = []
    for bi in range(NUM_BLOCKS):
        bk = jax.random.split(ks[3 + bi], 8)
        up_wt = (jax.random.normal(bk[0], (2 * INNER, D)) * 0.05).T     # (D, 2*INNER)
        conv_w = jax.random.normal(bk[1], (CONV_K, INNER)) * 0.1
        q_w = _block_diag_weight(bk[2], INNER, QKV_BS)
        k_w = _block_diag_weight(bk[3], INNER, QKV_BS)
        v_w = _block_diag_weight(bk[4], INNER, QKV_BS)
        ig_w = jax.random.normal(bk[5], (NH, 3 * INNER)) * 0.05
        ig_b = jax.random.normal(bk[6], (NH,)) * 0.1
        fg_w = jnp.zeros((NH, 3 * INNER))
        fg_b = jnp.linspace(3.0, 6.0, NH)
        gate_w = jnp.concatenate([ig_w, fg_w], axis=0)                  # (2*NH, 3*INNER)
        gq_t = gate_w[:, :INNER].T
        gk_t = gate_w[:, INNER:2 * INNER].T
        gv_t = gate_w[:, 2 * INNER:].T
        # fold the gate weights through the q/k/v projections:
        #   gates = q@gq + k@gk + v@gv + b
        #         = conv_act @ (Wq^T gq + Wk^T gk) + x_mlstm @ (Wv^T gv) + b
        qk_gate_cols = q_w.T @ gq_t + k_w.T @ gk_t                      # (INNER, 2*NH)
        v_gate_cols = v_w.T @ gv_t                                      # (INNER, 2*NH)
        qkg_wt = jnp.concatenate([q_w.T, k_w.T, qk_gate_cols], axis=1)  # (INNER, 2*INNER+2*NH)
        vg_wt = jnp.concatenate([v_w.T, v_gate_cols], axis=1)           # (INNER, INNER+2*NH)
        down_wt = (jax.random.normal(bk[7], (D, INNER)) * 0.05).T       # (INNER, D)
        per_block.append(dict(
            ln_w=jnp.ones((1, D)),
            up_wt=up_wt.astype(jnp.bfloat16),
            conv_w=conv_w,
            conv_b=jnp.zeros((1, INNER)),
            qkg_wt=qkg_wt.astype(jnp.bfloat16),
            vg_wt=vg_wt.astype(jnp.bfloat16),
            gate_b=jnp.concatenate([ig_b, fg_b]).reshape(1, 2 * NH),
            gn_w=jnp.ones((1, INNER)),
            skip=jnp.ones((1, INNER)),
            down_wt=down_wt.astype(jnp.bfloat16),
        ))
    stack = {k: jnp.stack([blk[k] for blk in per_block]) for k in per_block[0]}
    return {
        "embedding": jax.random.normal(ks[0], (V, D)) * small,
        "lm_head_wt": (jax.random.normal(ks[1], (V, D)) * small).T.astype(jnp.bfloat16),
        "post_norm_w": jnp.ones((1, D)),
        "stack": stack,
    }


# ----------------------------- forward -----------------------------------
def xlstm_lm_forward(idx, params):
    # TODO(synk): token_embedding gather is data-dependent; kept in plain JAX.
    x = params["embedding"][idx]                 # (B, S, D)
    # emb_dropout: Identity (add_embedding_dropout=False, dropout=0)
    x = xlstm_stack(x, params["stack"])          # ONE fused kernel for all blocks
    return final_norm_head(x, params["post_norm_w"], params["lm_head_wt"])


# ------------------------------- main -------------------------------------
if __name__ == "__main__":
    key = jax.random.PRNGKey(0)
    pkey, ikey = jax.random.split(key)
    params = init_params(pkey)
    idx = jax.random.randint(ikey, (B, S), 0, V, dtype=jnp.int32)

    logits = jax.jit(xlstm_lm_forward)(idx, params)
    jax.block_until_ready(logits)

    assert logits.shape == (B, S, V), logits.shape
    assert bool(jnp.all(jnp.isfinite(logits)))
    print("KERNEL_OK")
</pallas_src>

<mosaic_0001>
module attributes {stable_mosaic.version = 11 : i64} {
  func.func @_final_kernel(%arg0: i32, %arg1: memref<8x32xf32, #tpu.memory_space<vmem>>, %arg2: memref<1x32xf32, #tpu.memory_space<vmem>>, %arg3: memref<32x64xbf16, #tpu.memory_space<vmem>>, %arg4: memref<8x64xf32, #tpu.memory_space<vmem>>) attributes {dimension_semantics = [#tpu.dimension_semantics<parallel>], iteration_bounds = array<i64: 2>, scalar_prefetch = 0 : i64, scratch_operands = 0 : i64, tpu.core_type = #tpu.core_type<tc>, window_params = [{transform_indices = @transform_0, window_bounds = array<i64: 8, 32>}, {pipeline_mode = #tpu.pipeline_mode<synchronous>, transform_indices = @transform_1, window_bounds = array<i64: 1, 32>}, {pipeline_mode = #tpu.pipeline_mode<synchronous>, transform_indices = @transform_2, window_bounds = array<i64: 32, 64>}, {transform_indices = @transform_3, window_bounds = array<i64: 8, 64>}]} {
    %c0 = arith.constant 0 : index
    %c0_0 = arith.constant 0 : index
    %0 = vector.load %arg1[%c0, %c0_0] : memref<8x32xf32, #tpu.memory_space<vmem>>, vector<8x32xf32>
    %c0_1 = arith.constant 0 : index
    %c0_2 = arith.constant 0 : index
    %1 = vector.load %arg2[%c0_1, %c0_2] : memref<1x32xf32, #tpu.memory_space<vmem>>, vector<1x32xf32>
    %cst = arith.constant dense<0.000000e+00> : vector<8xf32>
    %2 = vector.multi_reduction <add>, %0, %cst [1] : vector<8x32xf32> to vector<8xf32>
    %3 = vector.shape_cast %2 : vector<8xf32> to vector<8x1xf32>
    %cst_3 = arith.constant 3.200000e+01 : f32
    %4 = vector.broadcast %cst_3 : f32 to vector<8x1xf32>
    %5 = arith.divf %3, %4 : vector<8x1xf32>
    %6 = vector.broadcast %5 : vector<8x1xf32> to vector<8x32xf32>
    %7 = arith.subf %0, %6 : vector<8x32xf32>
    %8 = arith.mulf %7, %7 : vector<8x32xf32>
    %cst_4 = arith.constant dense<0.000000e+00> : vector<8xf32>
    %9 = vector.multi_reduction <add>, %8, %cst_4 [1] : vector<8x32xf32> to vector<8xf32>
    %10 = vector.shape_cast %9 : vector<8xf32> to vector<8x1xf32>
    %cst_5 = arith.constant 3.200000e+01 : f32
    %11 = vector.broadcast %cst_5 : f32 to vector<8x1xf32>
    %12 = arith.divf %10, %11 : vector<8x1xf32>
    %13 = vector.broadcast %5 : vector<8x1xf32> to vector<8x32xf32>
    %14 = arith.subf %0, %13 : vector<8x32xf32>
    %cst_6 = arith.constant 9.99999974E-6 : f32
    %15 = vector.broadcast %cst_6 : f32 to vector<8x1xf32>
    %16 = arith.addf %12, %15 : vector<8x1xf32>
    %17 = math.rsqrt %16 : vector<8x1xf32>
    %18 = vector.broadcast %17 : vector<8x1xf32> to vector<8x32xf32>
    %19 = arith.mulf %14, %18 : vector<8x32xf32>
    %20 = vector.broadcast %1 : vector<1x32xf32> to vector<8x32xf32>
    %21 = arith.mulf %19, %20 : vector<8x32xf32>
    %22 = arith.truncf %21 : vector<8x32xf32> to vector<8x32xbf16>
    %c0_7 = arith.constant 0 : index
    %c0_8 = arith.constant 0 : index
    %23 = vector.load %arg3[%c0_7, %c0_8] : memref<32x64xbf16, #tpu.memory_space<vmem>>, vector<32x64xbf16>
    %cst_9 = arith.constant dense<0.000000e+00> : vector<8x64xf32>
    %24 = tpu.matmul %22, %23, %cst_9 {dimension_numbers = #tpu.dot_dimension_numbers<[1], [0], [0], [1], [0, 0, 1, 1], [], []>} : vector<8x32xbf16>, vector<32x64xbf16>, vector<8x64xf32> -> vector<8x64xf32>
    %c0_10 = arith.constant 0 : index
    %c0_11 = arith.constant 0 : index
    %25 = vector.load %arg4[%c0_10, %c0_11] : memref<8x64xf32, #tpu.memory_space<vmem>>, vector<8x64xf32>
    tpu.vector_store %arg4[%c0_10, %c0_11], %24 {strides = array<i32>} : memref<8x64xf32, #tpu.memory_space<vmem>>, vector<8x64xf32>,
    return
  }
  func.func @transform_0(%arg0: i32) -> (i32, i32) {
    %c0_i32 = arith.constant 0 : i32
    %c0_i32_0 = arith.constant 0 : i32
    return %arg0, %c0_i32 : i32, i32
  }
  func.func @transform_1(%arg0: i32) -> (i32, i32) {
    %c0_i32 = arith.constant 0 : i32
    %c0_i32_0 = arith.constant 0 : i32
    %c0_i32_1 = arith.constant 0 : i32
    return %c0_i32, %c0_i32_0 : i32, i32
  }
  func.func @transform_2(%arg0: i32) -> (i32, i32) {
    %c0_i32 = arith.constant 0 : i32
    %c0_i32_0 = arith.constant 0 : i32
    %c0_i32_1 = arith.constant 0 : i32
    return %c0_i32, %c0_i32_0 : i32, i32
  }
  func.func @transform_3(%arg0: i32) -> (i32, i32) {
    %c0_i32 = arith.constant 0 : i32
    %c0_i32_0 = arith.constant 0 : i32
    return %arg0, %c0_i32 : i32, i32
  }
}

module attributes {stable_mosaic.version = 11 : i64} {
  func.func @_xlstm_stack_kernel(%arg0: i32, %arg1: i32, %arg2: memref<1x8x32xf32, #tpu.memory_space<vmem>>, %arg3: memref<1x1x32xf32, #tpu.memory_space<vmem>>, %arg4: memref<1x32x128xbf16, #tpu.memory_space<vmem>>, %arg5: memref<1x4x64xf32, #tpu.memory_space<vmem>>, %arg6: memref<1x1x64xf32, #tpu.memory_space<vmem>>, %arg7: memref<1x64x136xbf16, #tpu.memory_space<vmem>>, %arg8: memref<1x64x72xbf16, #tpu.memory_space<vmem>>, %arg9: memref<1x1x8xf32, #tpu.memory_space<vmem>>, %arg10: memref<1x1x64xf32, #tpu.memory_space<vmem>>, %arg11: memref<1x1x64xf32, #tpu.memory_space<vmem>>, %arg12: memref<1x64x32xbf16, #tpu.memory_space<vmem>>, %arg13: memref<1x8x32xf32, #tpu.memory_space<vmem>>, %arg14: memref<8x32xf32, #tpu.memory_space<vmem>>, %arg15: memref<8x8xf32, #tpu.memory_space<vmem>>) attributes {dimension_semantics = [#tpu.dimension_semantics<parallel>, #tpu.dimension_semantics<arbitrary>], iteration_bounds = array<i64: 2, 2>, scalar_prefetch = 0 : i64, scratch_operands = 2 : i64, tpu.core_type = #tpu.core_type<tc>, window_params = [{transform_indices = @transform_0, window_bounds = array<i64: 1, 8, 32>}, {transform_indices = @transform_1, window_bounds = array<i64: 1, 1, 32>}, {transform_indices = @transform_2, window_bounds = array<i64: 1, 32, 128>}, {transform_indices = @transform_3, window_bounds = array<i64: 1, 4, 64>}, {transform_indices = @transform_4, window_bounds = array<i64: 1, 1, 64>}, {transform_indices = @transform_5, window_bounds = array<i64: 1, 64, 136>}, {transform_indices = @transform_6, window_bounds = array<i64: 1, 64, 72>}, {transform_indices = @transform_7, window_bounds = array<i64: 1, 1, 8>}, {transform_indices = @transform_8, window_bounds = array<i64: 1, 1, 64>}, {transform_indices = @transform_9, window_bounds = array<i64: 1, 1, 64>}, {transform_indices = @transform_10, window_bounds = array<i64: 1, 64, 32>}, {transform_indices = @transform_11, window_bounds = array<i64: 1, 8, 32>}]} {
    %c0_i32 = arith.constant 0 : i32
    %0 = arith.cmpi eq, %arg1, %c0_i32 : i32
    %1 = arith.extui %0 : i1 to i32
    %c0_i32_0 = arith.constant 0 : i32
    %2 = arith.cmpi ne, %1, %c0_i32_0 : i32
    scf.if %2 {
      %382 = tpu.iota {dimensions = array<i32: 0>} : vector<8x8xi32>
      %383 = tpu.iota {dimensions = array<i32: 1>} : vector<8x8xi32>
      %384 = arith.cmpi sge, %382, %383 : vector<8x8xi32>
      %385 = arith.extui %384 : vector<8x8xi1> to vector<8x8xi32>
      %386 = arith.sitofp %385 : vector<8x8xi32> to vector<8x8xf32>
      %c0_111 = arith.constant 0 : index
      %c0_112 = arith.constant 0 : index
      %387 = vector.load %arg15[%c0_111, %c0_112] : memref<8x8xf32, #tpu.memory_space<vmem>>, vector<8x8xf32>
      tpu.vector_store %arg15[%c0_111, %c0_112], %386 {strides = array<i32>} : memref<8x8xf32, #tpu.memory_space<vmem>>, vector<8x8xf32>,
      %c0_113 = arith.constant 0 : index
      %c0_114 = arith.constant 0 : index
      %c0_115 = arith.constant 0 : index
      %388 = vector.load %arg2[%c0_113, %c0_114, %c0_115] : memref<1x8x32xf32, #tpu.memory_space<vmem>>, vector<1x8x32xf32>
      %389 = vector.shape_cast %388 : vector<1x8x32xf32> to vector<8x32xf32>
      %c0_116 = arith.constant 0 : index
      %c0_117 = arith.constant 0 : index
      %390 = vector.load %arg14[%c0_116, %c0_117] : memref<8x32xf32, #tpu.memory_space<vmem>>, vector<8x32xf32>
      tpu.vector_store %arg14[%c0_116, %c0_117], %389 {strides = array<i32>} : memref<8x32xf32, #tpu.memory_space<vmem>>, vector<8x32xf32>,
    } else {
    }
    %c0 = arith.constant 0 : index
    %c0_1 = arith.constant 0 : index
    %3 = vector.load %arg14[%c0, %c0_1] : memref<8x32xf32, #tpu.memory_space<vmem>>, vector<8x32xf32>
    %c0_2 = arith.constant 0 : index
    %c0_3 = arith.constant 0 : index
    %4 = vector.load %arg15[%c0_2, %c0_3] : memref<8x8xf32, #tpu.memory_space<vmem>>, vector<8x8xf32>
    %c0_4 = arith.constant 0 : index
    %c0_5 = arith.constant 0 : index
    %c0_6 = arith.constant 0 : index
    %5 = vector.load %arg3[%c0_4, %c0_5, %c0_6] : memref<1x1x32xf32, #tpu.memory_space<vmem>>, vector<1x1x32xf32>
    %6 = vector.shape_cast %5 : vector<1x1x32xf32> to vector<1x32xf32>
    %cst = arith.constant dense<0.000000e+00> : vector<8xf32>
    %7 = vector.multi_reduction <add>, %3, %cst [1] : vector<8x32xf32> to vector<8xf32>
    %8 = vector.shape_cast %7 : vector<8xf32> to vector<8x1xf32>
    %cst_7 = arith.constant 3.200000e+01 : f32
    %9 = vector.broadcast %cst_7 : f32 to vector<8x1xf32>
    %10 = arith.divf %8, %9 : vector<8x1xf32>
    %11 = vector.broadcast %10 : vector<8x1xf32> to vector<8x32xf32>
    %12 = arith.subf %3, %11 : vector<8x32xf32>
    %13 = arith.mulf %12, %12 : vector<8x32xf32>
    %cst_8 = arith.constant dense<0.000000e+00> : vector<8xf32>
    %14 = vector.multi_reduction <add>, %13, %cst_8 [1] : vector<8x32xf32> to vector<8xf32>
    %15 = vector.shape_cast %14 : vector<8xf32> to vector<8x1xf32>
    %cst_9 = arith.constant 3.200000e+01 : f32
    %16 = vector.broadcast %cst_9 : f32 to vector<8x1xf32>
    %17 = arith.divf %15, %16 : vector<8x1xf32>
    %18 = vector.broadcast %10 : vector<8x1xf32> to vector<8x32xf32>
    %19 = arith.subf %3, %18 : vector<8x32xf32>
    %cst_10 = arith.constant 9.99999974E-6 : f32
    %20 = vector.broadcast %cst_10 : f32 to vector<8x1xf32>
    %21 = arith.addf %17, %20 : vector<8x1xf32>
    %22 = math.rsqrt %21 : vector<8x1xf32>
    %23 = vector.broadcast %22 : vector<8x1xf32> to vector<8x32xf32>
    %24 = arith.mulf %19, %23 : vector<8x32xf32>
    %25 = vector.broadcast %6 : vector<1x32xf32> to vector<8x32xf32>
    %26 = arith.mulf %24, %25 : vector<8x32xf32>
    %27 = arith.truncf %26 : vector<8x32xf32> to vector<8x32xbf16>
    %c0_11 = arith.constant 0 : index
    %c0_12 = arith.constant 0 : index
    %c0_13 = arith.constant 0 : index
    %28 = vector.load %arg4[%c0_11, %c0_12, %c0_13] : memref<1x32x128xbf16, #tpu.memory_space<vmem>>, vector<1x32x128xbf16>
    %29 = vector.shape_cast %28 : vector<1x32x128xbf16> to vector<32x128xbf16>
    %cst_14 = arith.constant dense<0.000000e+00> : vector<8x128xf32>
    %30 = tpu.matmul %27, %29, %cst_14 {dimension_numbers = #tpu.dot_dimension_numbers<[1], [0], [0], [1], [0, 0, 1, 1], [], []>} : vector<8x32xbf16>, vector<32x128xbf16>, vector<8x128xf32> -> vector<8x128xf32>
    %31 = vector.extract_strided_slice %30 {offsets = [0, 0], sizes = [8, 64], strides = [1, 1]} : vector<8x128xf32> to vector<8x64xf32>
    %32 = vector.extract_strided_slice %30 {offsets = [0, 64], sizes = [8, 64], strides = [1, 1]} : vector<8x128xf32> to vector<8x64xf32>
    %c0_15 = arith.constant 0 : index
    %c0_16 = arith.constant 0 : index
    %c0_17 = arith.constant 0 : index
    %33 = vector.load %arg5[%c0_15, %c0_16, %c0_17] : memref<1x4x64xf32, #tpu.memory_space<vmem>>, vector<1x4x64xf32>
    %34 = vector.shape_cast %33 : vector<1x4x64xf32> to vector<4x64xf32>
    %35 = vector.extract_strided_slice %34 {offsets = [3, 0], sizes = [1, 64], strides = [1, 1]} : vector<4x64xf32> to vector<1x64xf32>
    %36 = vector.broadcast %35 : vector<1x64xf32> to vector<8x64xf32>
    %37 = arith.mulf %31, %36 : vector<8x64xf32>
    %cst_18 = arith.constant 0.000000e+00 : f32
    %38 = vector.broadcast %cst_18 : f32 to vector<3x64xf32>
    %39 = vector.extract_strided_slice %31 {offsets = [0, 0], sizes = [5, 64], strides = [1, 1]} : vector<8x64xf32> to vector<5x64xf32>
    %40 = tpu.concatenate %38, %39 in 0 : vector<3x64xf32>, vector<5x64xf32> -> vector<8x64xf32>
    %41 = vector.extract_strided_slice %34 {offsets = [0, 0], sizes = [1, 64], strides = [1, 1]} : vector<4x64xf32> to vector<1x64xf32>
    %42 = vector.broadcast %41 : vector<1x64xf32> to vector<8x64xf32>
    %43 = arith.mulf %40, %42 : vector<8x64xf32>
    %44 = arith.addf %37, %43 : vector<8x64xf32>
    %cst_19 = arith.constant 0.000000e+00 : f32
    %45 = vector.broadcast %cst_19 : f32 to vector<2x64xf32>
    %46 = vector.extract_strided_slice %31 {offsets = [0, 0], sizes = [6, 64], strides = [1, 1]} : vector<8x64xf32> to vector<6x64xf32>
    %47 = tpu.concatenate %45, %46 in 0 : vector<2x64xf32>, vector<6x64xf32> -> vector<8x64xf32>
    %48 = vector.extract_strided_slice %34 {offsets = [1, 0], sizes = [1, 64], strides = [1, 1]} : vector<4x64xf32> to vector<1x64xf32>
    %49 = vector.broadcast %48 : vector<1x64xf32> to vector<8x64xf32>
    %50 = arith.mulf %47, %49 : vector<8x64xf32>
    %51 = arith.addf %44, %50 : vector<8x64xf32>
    %cst_20 = arith.constant 0.000000e+00 : f32
    %52 = vector.broadcast %cst_20 : f32 to vector<1x64xf32>
    %53 = vector.extract_strided_slice %31 {offsets = [0, 0], sizes = [7, 64], strides = [1, 1]} : vector<8x64xf32> to vector<7x64xf32>
    %54 = tpu.concatenate %52, %53 in 0 : vector<1x64xf32>, vector<7x64xf32> -> vector<8x64xf32>
    %55 = vector.extract_strided_slice %34 {offsets = [2, 0], sizes = [1, 64], strides = [1, 1]} : vector<4x64xf32> to vector<1x64xf32>
    %56 = vector.broadcast %55 : vector<1x64xf32> to vector<8x64xf32>
    %57 = arith.mulf %54, %56 : vector<8x64xf32>
    %58 = arith.addf %51, %57 : vector<8x64xf32>
    %c0_21 = arith.constant 0 : index
    %c0_22 = arith.constant 0 : index
    %c0_23 = arith.constant 0 : index
    %59 = vector.load %arg6[%c0_21, %c0_22, %c0_23] : memref<1x1x64xf32, #tpu.memory_space<vmem>>, vector<1x1x64xf32>
    %60 = vector.shape_cast %59 : vector<1x1x64xf32> to vector<1x64xf32>
    %61 = vector.broadcast %60 : vector<1x64xf32> to vector<8x64xf32>
    %62 = arith.addf %58, %61 : vector<8x64xf32>
    %63 = arith.negf %62 : vector<8x64xf32>
    %64 = math.exp %63 : vector<8x64xf32>
    %cst_24 = arith.constant 1.000000e+00 : f32
    %65 = vector.broadcast %cst_24 : f32 to vector<8x64xf32>
    %66 = arith.addf %65, %64 : vector<8x64xf32>
    %67 = arith.divf %65, %66 : vector<8x64xf32>
    %68 = arith.mulf %62, %67 : vector<8x64xf32>
    %69 = arith.truncf %68 : vector<8x64xf32> to vector<8x64xbf16>
    %c0_25 = arith.constant 0 : index
    %c0_26 = arith.constant 0 : index
    %c0_27 = arith.constant 0 : index
    %70 = vector.load %arg7[%c0_25, %c0_26, %c0_27] : memref<1x64x136xbf16, #tpu.memory_space<vmem>>, vector<1x64x136xbf16>
    %71 = vector.shape_cast %70 : vector<1x64x136xbf16> to vector<64x136xbf16>
    %cst_28 = arith.constant dense<0.000000e+00> : vector<8x136xf32>
    %72 = tpu.matmul %69, %71, %cst_28 {dimension_numbers = #tpu.dot_dimension_numbers<[1], [0], [0], [1], [0, 0, 1, 1], [], []>} : vector<8x64xbf16>, vector<64x136xbf16>, vector<8x136xf32> -> vector<8x136xf32>
    %73 = vector.extract_strided_slice %72 {offsets = [0, 0], sizes = [8, 64], strides = [1, 1]} : vector<8x136xf32> to vector<8x64xf32>
    %74 = vector.extract_strided_slice %72 {offsets = [0, 64], sizes = [8, 64], strides = [1, 1]} : vector<8x136xf32> to vector<8x64xf32>
    %75 = arith.truncf %31 : vector<8x64xf32> to vector<8x64xbf16>
    %c0_29 = arith.constant 0 : index
    %c0_30 = arith.constant 0 : index
    %c0_31 = arith.constant 0 : index
    %76 = vector.load %arg8[%c0_29, %c0_30, %c0_31] : memref<1x64x72xbf16, #tpu.memory_space<vmem>>, vector<1x64x72xbf16>
    %77 = vector.shape_cast %76 : vector<1x64x72xbf16> to vector<64x72xbf16>
    %cst_32 = arith.constant dense<0.000000e+00> : vector<8x72xf32>
    %78 = tpu.matmul %75, %77, %cst_32 {dimension_numbers = #tpu.dot_dimension_numbers<[1], [0], [0], [1], [0, 0, 1, 1], [], []>} : vector<8x64xbf16>, vector<64x72xbf16>, vector<8x72xf32> -> vector<8x72xf32>
    %79 = vector.extract_strided_slice %78 {offsets = [0, 0], sizes = [8, 64], strides = [1, 1]} : vector<8x72xf32> to vector<8x64xf32>
    %80 = vector.extract_strided_slice %72 {offsets = [0, 128], sizes = [8, 8], strides = [1, 1]} : vector<8x136xf32> to vector<8x8xf32>
    %81 = vector.extract_strided_slice %78 {offsets = [0, 64], sizes = [8, 8], strides = [1, 1]} : vector<8x72xf32> to vector<8x8xf32>
    %82 = arith.addf %80, %81 : vector<8x8xf32>
    %c0_33 = arith.constant 0 : index
    %c0_34 = arith.constant 0 : index
    %c0_35 = arith.constant 0 : index
    %83 = vector.load %arg9[%c0_33, %c0_34, %c0_35] : memref<1x1x8xf32, #tpu.memory_space<vmem>>, vector<1x1x8xf32>
    %84 = vector.shape_cast %83 : vector<1x1x8xf32> to vector<1x8xf32>
    %85 = vector.broadcast %84 : vector<1x8xf32> to vector<8x8xf32>
    %86 = arith.addf %82, %85 : vector<8x8xf32>
    %87 = vector.extract_strided_slice %86 {offsets = [0, 4], sizes = [8, 4], strides = [1, 1]} : vector<8x8xf32> to vector<8x4xf32>
    %cst_36 = arith.constant 0.000000e+00 : f32
    %88 = vector.broadcast %cst_36 : f32 to vector<8x4xf32>
    %89 = arith.subf %88, %87 : vector<8x4xf32>
    %cst_37 = arith.constant 0.000000e+00 : f32
    %90 = vector.broadcast %cst_37 : f32 to vector<8x4xf32>
    %91 = arith.maximumf %89, %90 : vector<8x4xf32>
    %92 = vector.broadcast %cst_37 : f32 to vector<8x4xf32>
    %93 = arith.subf %89, %92 : vector<8x4xf32>
    %94 = arith.cmpf one, %93, %93 : vector<8x4xf32>
    %95 = vector.broadcast %cst_37 : f32 to vector<8x4xf32>
    %96 = arith.addf %89, %95 : vector<8x4xf32>
    %97 = math.absf %93 : vector<8x4xf32>
    %cst_38 = arith.constant 0.000000e+00 : f32
    %98 = vector.broadcast %cst_38 : f32 to vector<8x4xf32>
    %99 = arith.subf %98, %97 : vector<8x4xf32>
    %100 = math.exp %99 : vector<8x4xf32>
    %101 = math.log1p %100 : vector<8x4xf32>
    %102 = arith.addf %91, %101 : vector<8x4xf32>
    %103 = arith.select %94, %96, %102 : vector<8x4xi1>, vector<8x4xf32>
    %cst_39 = arith.constant 0.000000e+00 : f32
    %104 = vector.broadcast %cst_39 : f32 to vector<8x4xf32>
    %105 = arith.subf %104, %103 : vector<8x4xf32>
    %cst_40 = arith.constant dense<0.000000e+00> : vector<8x4xf32>
    %106 = tpu.matmul %4, %105, %cst_40 {dimension_numbers = #tpu.dot_dimension_numbers<[1], [0], [0], [1], [0, 0, 1, 1], [], []>} : vector<8x8xf32>, vector<8x4xf32>, vector<8x4xf32> -> vector<8x4xf32>
    %107 = tpu.transpose %106, [1, 0] : vector<8x4xf32> -> vector<4x8xf32>
    %108 = vector.extract_strided_slice %86 {offsets = [0, 0], sizes = [8, 4], strides = [1, 1]} : vector<8x8xf32> to vector<8x4xf32>
    %109 = tpu.transpose %108, [1, 0] : vector<8x4xf32> -> vector<4x8xf32>
    %110 = arith.negf %32 : vector<8x64xf32>
    %111 = math.exp %110 : vector<8x64xf32>
    %cst_41 = arith.constant 1.000000e+00 : f32
    %112 = vector.broadcast %cst_41 : f32 to vector<8x64xf32>
    %113 = arith.addf %112, %111 : vector<8x64xf32>
    %114 = arith.divf %112, %113 : vector<8x64xf32>
    %115 = arith.mulf %32, %114 : vector<8x64xf32>
    %c0_42 = arith.constant 0 : index
    %c0_43 = arith.constant 0 : index
    %c0_44 = arith.constant 0 : index
    %116 = vector.load %arg10[%c0_42, %c0_43, %c0_44] : memref<1x1x64xf32, #tpu.memory_space<vmem>>, vector<1x1x64xf32>
    %117 = vector.shape_cast %116 : vector<1x1x64xf32> to vector<1x64xf32>
    %118 = vector.extract_strided_slice %73 {offsets = [0, 0], sizes = [8, 16], strides = [1, 1]} : vector<8x64xf32> to vector<8x16xf32>
    %119 = vector.extract_strided_slice %74 {offsets = [0, 0], sizes = [8, 16], strides = [1, 1]} : vector<8x64xf32> to vector<8x16xf32>
    %120 = vector.extract_strided_slice %79 {offsets = [0, 0], sizes = [8, 16], strides = [1, 1]} : vector<8x64xf32> to vector<8x16xf32>
    %121 = vector.extract_strided_slice %106 {offsets = [0, 0], sizes = [8, 1], strides = [1, 1]} : vector<8x4xf32> to vector<8x1xf32>
    %122 = vector.extract_strided_slice %107 {offsets = [0, 0], sizes = [1, 8], strides = [1, 1]} : vector<4x8xf32> to vector<1x8xf32>
    %123 = vector.extract_strided_slice %109 {offsets = [0, 0], sizes = [1, 8], strides = [1, 1]} : vector<4x8xf32> to vector<1x8xf32>
    %cst_45 = arith.constant 0.000000e+00 : f32
    %124 = vector.broadcast %cst_45 : f32 to vector<8x8xf32>
    %125 = arith.cmpf ogt, %4, %124 : vector<8x8xf32>
    %126 = vector.broadcast %121 : vector<8x1xf32> to vector<8x8xf32>
    %127 = vector.broadcast %122 : vector<1x8xf32> to vector<8x8xf32>
    %128 = arith.subf %126, %127 : vector<8x8xf32>
    %cst_46 = arith.constant 0xFF800000 : f32
    %129 = vector.broadcast %cst_46 : f32 to vector<8x8xf32>
    %130 = arith.select %125, %128, %129 : vector<8x8xi1>, vector<8x8xf32>
    %131 = vector.broadcast %123 : vector<1x8xf32> to vector<8x8xf32>
    %132 = arith.addf %130, %131 : vector<8x8xf32>
    %cst_47 = arith.constant dense<0xFF800000> : vector<8xf32>
    %133 = vector.multi_reduction <maximumf>, %132, %cst_47 [1] : vector<8x8xf32> to vector<8xf32>
    %134 = vector.shape_cast %133 : vector<8xf32> to vector<8x1xf32>
    %135 = vector.broadcast %134 : vector<8x1xf32> to vector<8x8xf32>
    %136 = arith.subf %132, %135 : vector<8x8xf32>
    %137 = math.exp %136 : vector<8x8xf32>
    %138 = arith.truncf %118 : vector<8x16xf32> to vector<8x16xbf16>
    %139 = arith.truncf %119 : vector<8x16xf32> to vector<8x16xbf16>
    %cst_48 = arith.constant dense<0.000000e+00> : vector<8x8xf32>
    %140 = tpu.matmul %138, %139, %cst_48 {dimension_numbers = #tpu.dot_dimension_numbers<[1], [1], [0], [0], [0, 0, 1, 0], [], []>} : vector<8x16xbf16>, vector<8x16xbf16>, vector<8x8xf32> -> vector<8x8xf32>
    %cst_49 = arith.constant 2.500000e-01 : f32
    %141 = vector.broadcast %cst_49 : f32 to vector<8x8xf32>
    %142 = arith.mulf %140, %141 : vector<8x8xf32>
    %143 = arith.mulf %142, %137 : vector<8x8xf32>
    %cst_50 = arith.constant dense<0.000000e+00> : vector<8xf32>
    %144 = vector.multi_reduction <add>, %143, %cst_50 [1] : vector<8x8xf32> to vector<8xf32>
    %145 = vector.shape_cast %144 : vector<8xf32> to vector<8x1xf32>
    %146 = math.absf %145 : vector<8x1xf32>
    %cst_51 = arith.constant 0.000000e+00 : f32
    %147 = vector.broadcast %cst_51 : f32 to vector<8x1xf32>
    %148 = arith.subf %147, %134 : vector<8x1xf32>
    %149 = math.exp %148 : vector<8x1xf32>
    %150 = arith.maximumf %146, %149 : vector<8x1xf32>
    %cst_52 = arith.constant 9.99999997E-7 : f32
    %151 = vector.broadcast %cst_52 : f32 to vector<8x1xf32>
    %152 = arith.addf %150, %151 : vector<8x1xf32>
    %153 = tpu.reciprocal %152 : vector<8x1xf32> -> vector<8x1xf32>
    %154 = vector.broadcast %153 : vector<8x1xf32> to vector<8x8xf32>
    %155 = arith.mulf %143, %154 : vector<8x8xf32>
    %156 = arith.truncf %155 : vector<8x8xf32> to vector<8x8xbf16>
    %157 = arith.truncf %120 : vector<8x16xf32> to vector<8x16xbf16>
    %cst_53 = arith.constant dense<0.000000e+00> : vector<8x16xf32>
    %158 = tpu.matmul %156, %157, %cst_53 {dimension_numbers = #tpu.dot_dimension_numbers<[1], [0], [0], [1], [0, 0, 1, 1], [], []>} : vector<8x8xbf16>, vector<8x16xbf16>, vector<8x16xf32> -> vector<8x16xf32>
    %159 = vector.extract_strided_slice %117 {offsets = [0, 0], sizes = [1, 16], strides = [1, 1]} : vector<1x64xf32> to vector<1x16xf32>
    %cst_54 = arith.constant dense<0.000000e+00> : vector<8xf32>
    %160 = vector.multi_reduction <add>, %158, %cst_54 [1] : vector<8x16xf32> to vector<8xf32>
    %161 = vector.shape_cast %160 : vector<8xf32> to vector<8x1xf32>
    %cst_55 = arith.constant 1.600000e+01 : f32
    %162 = vector.broadcast %cst_55 : f32 to vector<8x1xf32>
    %163 = arith.divf %161, %162 : vector<8x1xf32>
    %164 = vector.broadcast %163 : vector<8x1xf32> to vector<8x16xf32>
    %165 = arith.subf %158, %164 : vector<8x16xf32>
    %166 = arith.mulf %165, %165 : vector<8x16xf32>
    %cst_56 = arith.constant dense<0.000000e+00> : vector<8xf32>
    %167 = vector.multi_reduction <add>, %166, %cst_56 [1] : vector<8x16xf32> to vector<8xf32>
    %168 = vector.shape_cast %167 : vector<8xf32> to vector<8x1xf32>
    %cst_57 = arith.constant 1.600000e+01 : f32
    %169 = vector.broadcast %cst_57 : f32 to vector<8x1xf32>
    %170 = arith.divf %168, %169 : vector<8x1xf32>
    %171 = vector.broadcast %163 : vector<8x1xf32> to vector<8x16xf32>
    %172 = arith.subf %158, %171 : vector<8x16xf32>
    %cst_58 = arith.constant 9.99999974E-6 : f32
    %173 = vector.broadcast %cst_58 : f32 to vector<8x1xf32>
    %174 = arith.addf %170, %173 : vector<8x1xf32>
    %175 = math.rsqrt %174 : vector<8x1xf32>
    %176 = vector.broadcast %175 : vector<8x1xf32> to vector<8x16xf32>
    %177 = arith.mulf %172, %176 : vector<8x16xf32>
    %178 = vector.broadcast %159 : vector<1x16xf32> to vector<8x16xf32>
    %179 = arith.mulf %177, %178 : vector<8x16xf32>
    %180 = vector.extract_strided_slice %73 {offsets = [0, 16], sizes = [8, 16], strides = [1, 1]} : vector<8x64xf32> to vector<8x16xf32>
    %181 = vector.extract_strided_slice %74 {offsets = [0, 16], sizes = [8, 16], strides = [1, 1]} : vector<8x64xf32> to vector<8x16xf32>
    %182 = vector.extract_strided_slice %79 {offsets = [0, 16], sizes = [8, 16], strides = [1, 1]} : vector<8x64xf32> to vector<8x16xf32>
    %183 = vector.extract_strided_slice %106 {offsets = [0, 1], sizes = [8, 1], strides = [1, 1]} : vector<8x4xf32> to vector<8x1xf32>
    %184 = vector.extract_strided_slice %107 {offsets = [1, 0], sizes = [1, 8], strides = [1, 1]} : vector<4x8xf32> to vector<1x8xf32>
    %185 = vector.extract_strided_slice %109 {offsets = [1, 0], sizes = [1, 8], strides = [1, 1]} : vector<4x8xf32> to vector<1x8xf32>
    %cst_59 = arith.constant 0.000000e+00 : f32
    %186 = vector.broadcast %cst_59 : f32 to vector<8x8xf32>
    %187 = arith.cmpf ogt, %4, %186 : vector<8x8xf32>
    %188 = vector.broadcast %183 : vector<8x1xf32> to vector<8x8xf32>
    %189 = vector.broadcast %184 : vector<1x8xf32> to vector<8x8xf32>
    %190 = arith.subf %188, %189 : vector<8x8xf32>
    %cst_60 = arith.constant 0xFF800000 : f32
    %191 = vector.broadcast %cst_60 : f32 to vector<8x8xf32>
    %192 = arith.select %187, %190, %191 : vector<8x8xi1>, vector<8x8xf32>
    %193 = vector.broadcast %185 : vector<1x8xf32> to vector<8x8xf32>
    %194 = arith.addf %192, %193 : vector<8x8xf32>
    %cst_61 = arith.constant dense<0xFF800000> : vector<8xf32>
    %195 = vector.multi_reduction <maximumf>, %194, %cst_61 [1] : vector<8x8xf32> to vector<8xf32>
    %196 = vector.shape_cast %195 : vector<8xf32> to vector<8x1xf32>
    %197 = vector.broadcast %196 : vector<8x1xf32> to vector<8x8xf32>
    %198 = arith.subf %194, %197 : vector<8x8xf32>
    %199 = math.exp %198 : vector<8x8xf32>
    %200 = arith.truncf %180 : vector<8x16xf32> to vector<8x16xbf16>
    %201 = arith.truncf %181 : vector<8x16xf32> to vector<8x16xbf16>
    %cst_62 = arith.constant dense<0.000000e+00> : vector<8x8xf32>
    %202 = tpu.matmul %200, %201, %cst_62 {dimension_numbers = #tpu.dot_dimension_numbers<[1], [1], [0], [0], [0, 0, 1, 0], [], []>} : vector<8x16xbf16>, vector<8x16xbf16>, vector<8x8xf32> -> vector<8x8xf32>
    %cst_63 = arith.constant 2.500000e-01 : f32
    %203 = vector.broadcast %cst_63 : f32 to vector<8x8xf32>
    %204 = arith.mulf %202, %203 : vector<8x8xf32>
    %205 = arith.mulf %204, %199 : vector<8x8xf32>
    %cst_64 = arith.constant dense<0.000000e+00> : vector<8xf32>
    %206 = vector.multi_reduction <add>, %205, %cst_64 [1] : vector<8x8xf32> to vector<8xf32>
    %207 = vector.shape_cast %206 : vector<8xf32> to vector<8x1xf32>
    %208 = math.absf %207 : vector<8x1xf32>
    %cst_65 = arith.constant 0.000000e+00 : f32
    %209 = vector.broadcast %cst_65 : f32 to vector<8x1xf32>
    %210 = arith.subf %209, %196 : vector<8x1xf32>
    %211 = math.exp %210 : vector<8x1xf32>
    %212 = arith.maximumf %208, %211 : vector<8x1xf32>
    %cst_66 = arith.constant 9.99999997E-7 : f32
    %213 = vector.broadcast %cst_66 : f32 to vector<8x1xf32>
    %214 = arith.addf %212, %213 : vector<8x1xf32>
    %215 = tpu.reciprocal %214 : vector<8x1xf32> -> vector<8x1xf32>
    %216 = vector.broadcast %215 : vector<8x1xf32> to vector<8x8xf32>
    %217 = arith.mulf %205, %216 : vector<8x8xf32>
    %218 = arith.truncf %217 : vector<8x8xf32> to vector<8x8xbf16>
    %219 = arith.truncf %182 : vector<8x16xf32> to vector<8x16xbf16>
    %cst_67 = arith.constant dense<0.000000e+00> : vector<8x16xf32>
    %220 = tpu.matmul %218, %219, %cst_67 {dimension_numbers = #tpu.dot_dimension_numbers<[1], [0], [0], [1], [0, 0, 1, 1], [], []>} : vector<8x8xbf16>, vector<8x16xbf16>, vector<8x16xf32> -> vector<8x16xf32>
    %221 = vector.extract_strided_slice %117 {offsets = [0, 16], sizes = [1, 16], strides = [1, 1]} : vector<1x64xf32> to vector<1x16xf32>
    %cst_68 = arith.constant dense<0.000000e+00> : vector<8xf32>
    %222 = vector.multi_reduction <add>, %220, %cst_68 [1] : vector<8x16xf32> to vector<8xf32>
    %223 = vector.shape_cast %222 : vector<8xf32> to vector<8x1xf32>
    %cst_69 = arith.constant 1.600000e+01 : f32
    %224 = vector.broadcast %cst_69 : f32 to vector<8x1xf32>
    %225 = arith.divf %223, %224 : vector<8x1xf32>
    %226 = vector.broadcast %225 : vector<8x1xf32> to vector<8x16xf32>
    %227 = arith.subf %220, %226 : vector<8x16xf32>
    %228 = arith.mulf %227, %227 : vector<8x16xf32>
    %cst_70 = arith.constant dense<0.000000e+00> : vector<8xf32>
    %229 = vector.multi_reduction <add>, %228, %cst_70 [1] : vector<8x16xf32> to vector<8xf32>
    %230 = vector.shape_cast %229 : vector<8xf32> to vector<8x1xf32>
    %cst_71 = arith.constant 1.600000e+01 : f32
    %231 = vector.broadcast %cst_71 : f32 to vector<8x1xf32>
    %232 = arith.divf %230, %231 : vector<8x1xf32>
    %233 = vector.broadcast %225 : vector<8x1xf32> to vector<8x16xf32>
    %234 = arith.subf %220, %233 : vector<8x16xf32>
    %cst_72 = arith.constant 9.99999974E-6 : f32
    %235 = vector.broadcast %cst_72 : f32 to vector<8x1xf32>
    %236 = arith.addf %232, %235 : vector<8x1xf32>
    %237 = math.rsqrt %236 : vector<8x1xf32>
    %238 = vector.broadcast %237 : vector<8x1xf32> to vector<8x16xf32>
    %239 = arith.mulf %234, %238 : vector<8x16xf32>
    %240 = vector.broadcast %221 : vector<1x16xf32> to vector<8x16xf32>
    %241 = arith.mulf %239, %240 : vector<8x16xf32>
    %242 = vector.extract_strided_slice %73 {offsets = [0, 32], sizes = [8, 16], strides = [1, 1]} : vector<8x64xf32> to vector<8x16xf32>
    %243 = vector.extract_strided_slice %74 {offsets = [0, 32], sizes = [8, 16], strides = [1, 1]} : vector<8x64xf32> to vector<8x16xf32>
    %244 = vector.extract_strided_slice %79 {offsets = [0, 32], sizes = [8, 16], strides = [1, 1]} : vector<8x64xf32> to vector<8x16xf32>
    %245 = vector.extract_strided_slice %106 {offsets = [0, 2], sizes = [8, 1], strides = [1, 1]} : vector<8x4xf32> to vector<8x1xf32>
    %246 = vector.extract_strided_slice %107 {offsets = [2, 0], sizes = [1, 8], strides = [1, 1]} : vector<4x8xf32> to vector<1x8xf32>
    %247 = vector.extract_strided_slice %109 {offsets = [2, 0], sizes = [1, 8], strides = [1, 1]} : vector<4x8xf32> to vector<1x8xf32>
    %cst_73 = arith.constant 0.000000e+00 : f32
    %248 = vector.broadcast %cst_73 : f32 to vector<8x8xf32>
    %249 = arith.cmpf ogt, %4, %248 : vector<8x8xf32>
    %250 = vector.broadcast %245 : vector<8x1xf32> to vector<8x8xf32>
    %251 = vector.broadcast %246 : vector<1x8xf32> to vector<8x8xf32>
    %252 = arith.subf %250, %251 : vector<8x8xf32>
    %cst_74 = arith.constant 0xFF800000 : f32
    %253 = vector.broadcast %cst_74 : f32 to vector<8x8xf32>
    %254 = arith.select %249, %252, %253 : vector<8x8xi1>, vector<8x8xf32>
    %255 = vector.broadcast %247 : vector<1x8xf32> to vector<8x8xf32>
    %256 = arith.addf %254, %255 : vector<8x8xf32>
    %cst_75 = arith.constant dense<0xFF800000> : vector<8xf32>
    %257 = vector.multi_reduction <maximumf>, %256, %cst_75 [1] : vector<8x8xf32> to vector<8xf32>
    %258 = vector.shape_cast %257 : vector<8xf32> to vector<8x1xf32>
    %259 = vector.broadcast %258 : vector<8x1xf32> to vector<8x8xf32>
    %260 = arith.subf %256, %259 : vector<8x8xf32>
    %261 = math.exp %260 : vector<8x8xf32>
    %262 = arith.truncf %242 : vector<8x16xf32> to vector<8x16xbf16>
    %263 = arith.truncf %243 : vector<8x16xf32> to vector<8x16xbf16>
    %cst_76 = arith.constant dense<0.000000e+00> : vector<8x8xf32>
    %264 = tpu.matmul %262, %263, %cst_76 {dimension_numbers = #tpu.dot_dimension_numbers<[1], [1], [0], [0], [0, 0, 1, 0], [], []>} : vector<8x16xbf16>, vector<8x16xbf16>, vector<8x8xf32> -> vector<8x8xf32>
    %cst_77 = arith.constant 2.500000e-01 : f32
    %265 = vector.broadcast %cst_77 : f32 to vector<8x8xf32>
    %266 = arith.mulf %264, %265 : vector<8x8xf32>
    %267 = arith.mulf %266, %261 : vector<8x8xf32>
    %cst_78 = arith.constant dense<0.000000e+00> : vector<8xf32>
    %268 = vector.multi_reduction <add>, %267, %cst_78 [1] : vector<8x8xf32> to vector<8xf32>
    %269 = vector.shape_cast %268 : vector<8xf32> to vector<8x1xf32>
    %270 = math.absf %269 : vector<8x1xf32>
    %cst_79 = arith.constant 0.000000e+00 : f32
    %271 = vector.broadcast %cst_79 : f32 to vector<8x1xf32>
    %272 = arith.subf %271, %258 : vector<8x1xf32>
    %273 = math.exp %272 : vector<8x1xf32>
    %274 = arith.maximumf %270, %273 : vector<8x1xf32>
    %cst_80 = arith.constant 9.99999997E-7 : f32
    %275 = vector.broadcast %cst_80 : f32 to vector<8x1xf32>
    %276 = arith.addf %274, %275 : vector<8x1xf32>
    %277 = tpu.reciprocal %276 : vector<8x1xf32> -> vector<8x1xf32>
    %278 = vector.broadcast %277 : vector<8x1xf32> to vector<8x8xf32>
    %279 = arith.mulf %267, %278 : vector<8x8xf32>
    %280 = arith.truncf %279 : vector<8x8xf32> to vector<8x8xbf16>
    %281 = arith.truncf %244 : vector<8x16xf32> to vector<8x16xbf16>
    %cst_81 = arith.constant dense<0.000000e+00> : vector<8x16xf32>
    %282 = tpu.matmul %280, %281, %cst_81 {dimension_numbers = #tpu.dot_dimension_numbers<[1], [0], [0], [1], [0, 0, 1, 1], [], []>} : vector<8x8xbf16>, vector<8x16xbf16>, vector<8x16xf32> -> vector<8x16xf32>
    %283 = vector.extract_strided_slice %117 {offsets = [0, 32], sizes = [1, 16], strides = [1, 1]} : vector<1x64xf32> to vector<1x16xf32>
    %cst_82 = arith.constant dense<0.000000e+00> : vector<8xf32>
    %284 = vector.multi_reduction <add>, %282, %cst_82 [1] : vector<8x16xf32> to vector<8xf32>
    %285 = vector.shape_cast %284 : vector<8xf32> to vector<8x1xf32>
    %cst_83 = arith.constant 1.600000e+01 : f32
    %286 = vector.broadcast %cst_83 : f32 to vector<8x1xf32>
    %287 = arith.divf %285, %286 : vector<8x1xf32>
    %288 = vector.broadcast %287 : vector<8x1xf32> to vector<8x16xf32>
    %289 = arith.subf %282, %288 : vector<8x16xf32>
    %290 = arith.mulf %289, %289 : vector<8x16xf32>
    %cst_84 = arith.constant dense<0.000000e+00> : vector<8xf32>
    %291 = vector.multi_reduction <add>, %290, %cst_84 [1] : vector<8x16xf32> to vector<8xf32>
    %292 = vector.shape_cast %291 : vector<8xf32> to vector<8x1xf32>
    %cst_85 = arith.constant 1.600000e+01 : f32
    %293 = vector.broadcast %cst_85 : f32 to vector<8x1xf32>
    %294 = arith.divf %292, %293 : vector<8x1xf32>
    %295 = vector.broadcast %287 : vector<8x1xf32> to vector<8x16xf32>
    %296 = arith.subf %282, %295 : vector<8x16xf32>
    %cst_86 = arith.constant 9.99999974E-6 : f32
    %297 = vector.broadcast %cst_86 : f32 to vector<8x1xf32>
    %298 = arith.addf %294, %297 : vector<8x1xf32>
    %299 = math.rsqrt %298 : vector<8x1xf32>
    %300 = vector.broadcast %299 : vector<8x1xf32> to vector<8x16xf32>
    %301 = arith.mulf %296, %300 : vector<8x16xf32>
    %302 = vector.broadcast %283 : vector<1x16xf32> to vector<8x16xf32>
    %303 = arith.mulf %301, %302 : vector<8x16xf32>
    %304 = vector.extract_strided_slice %73 {offsets = [0, 48], sizes = [8, 16], strides = [1, 1]} : vector<8x64xf32> to vector<8x16xf32>
    %305 = vector.extract_strided_slice %74 {offsets = [0, 48], sizes = [8, 16], strides = [1, 1]} : vector<8x64xf32> to vector<8x16xf32>
    %306 = vector.extract_strided_slice %79 {offsets = [0, 48], sizes = [8, 16], strides = [1, 1]} : vector<8x64xf32> to vector<8x16xf32>
    %307 = vector.extract_strided_slice %106 {offsets = [0, 3], sizes = [8, 1], strides = [1, 1]} : vector<8x4xf32> to vector<8x1xf32>
    %308 = vector.extract_strided_slice %107 {offsets = [3, 0], sizes = [1, 8], strides = [1, 1]} : vector<4x8xf32> to vector<1x8xf32>
    %309 = vector.extract_strided_slice %109 {offsets = [3, 0], sizes = [1, 8], strides = [1, 1]} : vector<4x8xf32> to vector<1x8xf32>
    %cst_87 = arith.constant 0.000000e+00 : f32
    %310 = vector.broadcast %cst_87 : f32 to vector<8x8xf32>
    %311 = arith.cmpf ogt, %4, %310 : vector<8x8xf32>
    %312 = vector.broadcast %307 : vector<8x1xf32> to vector<8x8xf32>
    %313 = vector.broadcast %308 : vector<1x8xf32> to vector<8x8xf32>
    %314 = arith.subf %312, %313 : vector<8x8xf32>
    %cst_88 = arith.constant 0xFF800000 : f32
    %315 = vector.broadcast %cst_88 : f32 to vector<8x8xf32>
    %316 = arith.select %311, %314, %315 : vector<8x8xi1>, vector<8x8xf32>
    %317 = vector.broadcast %309 : vector<1x8xf32> to vector<8x8xf32>
    %318 = arith.addf %316, %317 : vector<8x8xf32>
    %cst_89 = arith.constant dense<0xFF800000> : vector<8xf32>
    %319 = vector.multi_reduction <maximumf>, %318, %cst_89 [1] : vector<8x8xf32> to vector<8xf32>
    %320 = vector.shape_cast %319 : vector<8xf32> to vector<8x1xf32>
    %321 = vector.broadcast %320 : vector<8x1xf32> to vector<8x8xf32>
    %322 = arith.subf %318, %321 : vector<8x8xf32>
    %323 = math.exp %322 : vector<8x8xf32>
    %324 = arith.truncf %304 : vector<8x16xf32> to vector<8x16xbf16>
    %325 = arith.truncf %305 : vector<8x16xf32> to vector<8x16xbf16>
    %cst_90 = arith.constant dense<0.000000e+00> : vector<8x8xf32>
    %326 = tpu.matmul %324, %325, %cst_90 {dimension_numbers = #tpu.dot_dimension_numbers<[1], [1], [0], [0], [0, 0, 1, 0], [], []>} : vector<8x16xbf16>, vector<8x16xbf16>, vector<8x8xf32> -> vector<8x8xf32>
    %cst_91 = arith.constant 2.500000e-01 : f32
    %327 = vector.broadcast %cst_91 : f32 to vector<8x8xf32>
    %328 = arith.mulf %326, %327 : vector<8x8xf32>
    %329 = arith.mulf %328, %323 : vector<8x8xf32>
    %cst_92 = arith.constant dense<0.000000e+00> : vector<8xf32>
    %330 = vector.multi_reduction <add>, %329, %cst_92 [1] : vector<8x8xf32> to vector<8xf32>
    %331 = vector.shape_cast %330 : vector<8xf32> to vector<8x1xf32>
    %332 = math.absf %331 : vector<8x1xf32>
    %cst_93 = arith.constant 0.000000e+00 : f32
    %333 = vector.broadcast %cst_93 : f32 to vector<8x1xf32>
    %334 = arith.subf %333, %320 : vector<8x1xf32>
    %335 = math.exp %334 : vector<8x1xf32>
    %336 = arith.maximumf %332, %335 : vector<8x1xf32>
    %cst_94 = arith.constant 9.99999997E-7 : f32
    %337 = vector.broadcast %cst_94 : f32 to vector<8x1xf32>
    %338 = arith.addf %336, %337 : vector<8x1xf32>
    %339 = tpu.reciprocal %338 : vector<8x1xf32> -> vector<8x1xf32>
    %340 = vector.broadcast %339 : vector<8x1xf32> to vector<8x8xf32>
    %341 = arith.mulf %329, %340 : vector<8x8xf32>
    %342 = arith.truncf %341 : vector<8x8xf32> to vector<8x8xbf16>
    %343 = arith.truncf %306 : vector<8x16xf32> to vector<8x16xbf16>
    %cst_95 = arith.constant dense<0.000000e+00> : vector<8x16xf32>
    %344 = tpu.matmul %342, %343, %cst_95 {dimension_numbers = #tpu.dot_dimension_numbers<[1], [0], [0], [1], [0, 0, 1, 1], [], []>} : vector<8x8xbf16>, vector<8x16xbf16>, vector<8x16xf32> -> vector<8x16xf32>
    %345 = vector.extract_strided_slice %117 {offsets = [0, 48], sizes = [1, 16], strides = [1, 1]} : vector<1x64xf32> to vector<1x16xf32>
    %cst_96 = arith.constant dense<0.000000e+00> : vector<8xf32>
    %346 = vector.multi_reduction <add>, %344, %cst_96 [1] : vector<8x16xf32> to vector<8xf32>
    %347 = vector.shape_cast %346 : vector<8xf32> to vector<8x1xf32>
    %cst_97 = arith.constant 1.600000e+01 : f32
    %348 = vector.broadcast %cst_97 : f32 to vector<8x1xf32>
    %349 = arith.divf %347, %348 : vector<8x1xf32>
    %350 = vector.broadcast %349 : vector<8x1xf32> to vector<8x16xf32>
    %351 = arith.subf %344, %350 : vector<8x16xf32>
    %352 = arith.mulf %351, %351 : vector<8x16xf32>
    %cst_98 = arith.constant dense<0.000000e+00> : vector<8xf32>
    %353 = vector.multi_reduction <add>, %352, %cst_98 [1] : vector<8x16xf32> to vector<8xf32>
    %354 = vector.shape_cast %353 : vector<8xf32> to vector<8x1xf32>
    %cst_99 = arith.constant 1.600000e+01 : f32
    %355 = vector.broadcast %cst_99 : f32 to vector<8x1xf32>
    %356 = arith.divf %354, %355 : vector<8x1xf32>
    %357 = vector.broadcast %349 : vector<8x1xf32> to vector<8x16xf32>
    %358 = arith.subf %344, %357 : vector<8x16xf32>
    %cst_100 = arith.constant 9.99999974E-6 : f32
    %359 = vector.broadcast %cst_100 : f32 to vector<8x1xf32>
    %360 = arith.addf %356, %359 : vector<8x1xf32>
    %361 = math.rsqrt %360 : vector<8x1xf32>
    %362 = vector.broadcast %361 : vector<8x1xf32> to vector<8x16xf32>
    %363 = arith.mulf %358, %362 : vector<8x16xf32>
    %364 = vector.broadcast %345 : vector<1x16xf32> to vector<8x16xf32>
    %365 = arith.mulf %363, %364 : vector<8x16xf32>
    %366 = tpu.concatenate %179, %241, %303, %365 in 1 : vector<8x16xf32>, vector<8x16xf32>, vector<8x16xf32>, vector<8x16xf32> -> vector<8x64xf32>
    %c0_101 = arith.constant 0 : index
    %c0_102 = arith.constant 0 : index
    %c0_103 = arith.constant 0 : index
    %367 = vector.load %arg11[%c0_101, %c0_102, %c0_103] : memref<1x1x64xf32, #tpu.memory_space<vmem>>, vector<1x1x64xf32>
    %368 = vector.shape_cast %367 : vector<1x1x64xf32> to vector<1x64xf32>
    %369 = vector.broadcast %368 : vector<1x64xf32> to vector<8x64xf32>
    %370 = arith.mulf %369, %68 : vector<8x64xf32>
    %371 = arith.addf %366, %370 : vector<8x64xf32>
    %372 = arith.mulf %371, %115 : vector<8x64xf32>
    %373 = arith.truncf %372 : vector<8x64xf32> to vector<8x64xbf16>
    %c0_104 = arith.constant 0 : index
    %c0_105 = arith.constant 0 : index
    %c0_106 = arith.constant 0 : index
    %374 = vector.load %arg12[%c0_104, %c0_105, %c0_106] : memref<1x64x32xbf16, #tpu.memory_space<vmem>>, vector<1x64x32xbf16>
    %375 = vector.shape_cast %374 : vector<1x64x32xbf16> to vector<64x32xbf16>
    %cst_107 = arith.constant dense<0.000000e+00> : vector<8x32xf32>
    %376 = tpu.matmul %373, %375, %cst_107 {dimension_numbers = #tpu.dot_dimension_numbers<[1], [0], [0], [1], [0, 0, 1, 1], [], []>} : vector<8x64xbf16>, vector<64x32xbf16>, vector<8x32xf32> -> vector<8x32xf32>
    %377 = arith.addf %3, %376 : vector<8x32xf32>
    %c0_108 = arith.constant 0 : index
    %c0_109 = arith.constant 0 : index
    %378 = vector.load %arg14[%c0_108, %c0_109] : memref<8x32xf32, #tpu.memory_space<vmem>>, vector<8x32xf32>
    tpu.vector_store %arg14[%c0_108, %c0_109], %377 {strides = array<i32>} : memref<8x32xf32, #tpu.memory_space<vmem>>, vector<8x32xf32>,
    %c1_i32 = arith.constant 1 : i32
    %379 = arith.cmpi eq, %arg1, %c1_i32 : i32
    %380 = arith.extui %379 : i1 to i32
    %c0_i32_110 = arith.constant 0 : i32
    %381 = arith.cmpi ne, %380, %c0_i32_110 : i32
    scf.if %381 {
      %c0_111 = arith.constant 0 : index
      %c0_112 = arith.constant 0 : index
      %c0_113 = arith.constant 0 : index
      %382 = vector.load %arg13[%c0_111, %c0_112, %c0_113] : memref<1x8x32xf32, #tpu.memory_space<vmem>>, vector<1x8x32xf32>
      %383 = vector.shape_cast %382 : vector<1x8x32xf32> to vector<8x32xf32>
      %384 = vector.shape_cast %377 : vector<8x32xf32> to vector<1x8x32xf32>
      tpu.vector_store %arg13[%c0_111, %c0_112, %c0_113], %384 {strides = array<i32>} : memref<1x8x32xf32, #tpu.memory_space<vmem>>, vector<1x8x32xf32>,
    } else {
    }
    return
  }
  func.func @transform_0(%arg0: i32, %arg1: i32) -> (i32, i32, i32) {
    %c0_i32 = arith.constant 0 : i32
    %c0_i32_0 = arith.constant 0 : i32
    %c0_i32_1 = arith.constant 0 : i32
    return %arg0, %c0_i32, %c0_i32_0 : i32, i32, i32
  }
  func.func @transform_1(%arg0: i32, %arg1: i32) -> (i32, i32, i32) {
    %c0_i32 = arith.constant 0 : i32
    %c0_i32_0 = arith.constant 0 : i32
    %c0_i32_1 = arith.constant 0 : i32
    return %arg1, %c0_i32, %c0_i32_0 : i32, i32, i32
  }
  func.func @transform_2(%arg0: i32, %arg1: i32) -> (i32, i32, i32) {
    %c0_i32 = arith.constant 0 : i32
    %c0_i32_0 = arith.constant 0 : i32
    %c0_i32_1 = arith.constant 0 : i32
    return %arg1, %c0_i32, %c0_i32_0 : i32, i32, i32
  }
  func.func @transform_3(%arg0: i32, %arg1: i32) -> (i32, i32, i32) {
    %c0_i32 = arith.constant 0 : i32
    %c0_i32_0 = arith.constant 0 : i32
    %c0_i32_1 = arith.constant 0 : i32
    return %arg1, %c0_i32, %c0_i32_0 : i32, i32, i32
  }
  func.func @transform_4(%arg0: i32, %arg1: i32) -> (i32, i32, i32) {
    %c0_i32 = arith.constant 0 : i32
    %c0_i32_0 = arith.constant 0 : i32
    %c0_i32_1 = arith.constant 0 : i32
    return %arg1, %c0_i32, %c0_i32_0 : i32, i32, i32
  }
  func.func @transform_5(%arg0: i32, %arg1: i32) -> (i32, i32, i32) {
    %c0_i32 = arith.constant 0 : i32
    %c0_i32_0 = arith.constant 0 : i32
    %c0_i32_1 = arith.constant 0 : i32
    return %arg1, %c0_i32, %c0_i32_0 : i32, i32, i32
  }
  func.func @transform_6(%arg0: i32, %arg1: i32) -> (i32, i32, i32) {
    %c0_i32 = arith.constant 0 : i32
    %c0_i32_0 = arith.constant 0 : i32
    %c0_i32_1 = arith.constant 0 : i32
    return %arg1, %c0_i32, %c0_i32_0 : i32, i32, i32
  }
  func.func @transform_7(%arg0: i32, %arg1: i32) -> (i32, i32, i32) {
    %c0_i32 = arith.constant 0 : i32
    %c0_i32_0 = arith.constant 0 : i32
    %c0_i32_1 = arith.constant 0 : i32
    return %arg1, %c0_i32, %c0_i32_0 : i32, i32, i32
  }
  func.func @transform_8(%arg0: i32, %arg1: i32) -> (i32, i32, i32) {
    %c0_i32 = arith.constant 0 : i32
    %c0_i32_0 = arith.constant 0 : i32
    %c0_i32_1 = arith.constant 0 : i32
    return %arg1, %c0_i32, %c0_i32_0 : i32, i32, i32
  }
  func.func @transform_9(%arg0: i32, %arg1: i32) -> (i32, i32, i32) {
    %c0_i32 = arith.constant 0 : i32
    %c0_i32_0 = arith.constant 0 : i32
    %c0_i32_1 = arith.constant 0 : i32
    return %arg1, %c0_i32, %c0_i32_0 : i32, i32, i32
  }
  func.func @transform_10(%arg0: i32, %arg1: i32) -> (i32, i32, i32) {
    %c0_i32 = arith.constant 0 : i32
    %c0_i32_0 = arith.constant 0 : i32
    %c0_i32_1 = arith.constant 0 : i32
    return %arg1, %c0_i32, %c0_i32_0 : i32, i32, i32
  }
  func.func @transform_11(%arg0: i32, %arg1: i32) -> (i32, i32, i32) {
    %c0_i32 = arith.constant 0 : i32
    %c0_i32_0 = arith.constant 0 : i32
    %c0_i32_1 = arith.constant 0 : i32
    return %arg0, %c0_i32, %c0_i32_0 : i32, i32, i32
  }
}

</mosaic_0001>

<llo_original>
// kernel: xlstm_lm_forward.3
$region0: #{xlstm_lm_forward.3}
  #allocation0 [shape = 'u32[]', space=smem, size = 0x4, offset = 0x4, fixed_abs, tag = 'smem constant byte address 0x4 - core index']
  #allocation1 [shape = 'u32[144,128]{1,0:T(1,128)}', space=vmem, size = 0x12000, scoped, tag = 'internal scratch']
  %s0 = inlined_call_operand.vmem [shape: f32[16,32], index: 0, kind: input, shape index: {}]
  %s1 = inlined_call_operand.vmem [shape: f32[1,32], index: 1, kind: input, shape index: {}]
  %s2 = inlined_call_operand.vmem [shape: bf16[32,64], index: 2, kind: input, shape index: {}]
  %s3 = inlined_call_operand.hbm [shape: f32[16,64], index: 3, kind: output, shape index: {}]
  %s4 = sld [smem:[#allocation0]]
  $region45: #{xlstm_lm_forward.3} parent=0
    _
  %s6 = ssub.s32 1, %s4
  %s7 = scalar_select 0, %s6, %s4
  $region1: #{xlstm_lm_forward.3} parent=0
    #allocation2 [shape = 'u8[8192]{0}', space=vmem, size = 0x2000, scoped, tag = 'output window, operand 0']
    #allocation3 [shape = 's32[2]{0}', space=sflag, size = 0x8, scoped, tag = 'scoped memory for xlstm_lm_forward.3']
    %8 = vsyncpa [#allocation3], 0
    %s9 = scalar_lea.sflag [#allocation3], 1
    %10 = vsyncpa %s9, 0
    loop: start=0, step=1, limit=4
    $region2: #{xlstm_lm_forward.3} parent=1 // loop_pre_header
      _
    $region3: #{xlstm_lm_forward.3} parent=1 // loop_header
      %s12 = sphi 0, %s16
      %p13 = scmp.ge.s32.totalorder %s12, 4
      %s22 = sphi 0, %s24
      %s25 = sphi 0, %s22
      %s26 = sphi 0, %s25
      %s42 = sphi 0, %s26
      %s46 = sphi 0, %s46
      %s48 = sphi 0, %s46
      %s49 = sphi 0, %s48
      %s63 = sphi 0, %s49
      %s67 = sphi 0, %s67
      %s69 = sphi 0, %s67
      %s70 = sphi 0, %s69
      %s84 = sphi 0, %s70
      %s90 = sphi 0, %s92
      %s93 = sphi 0, %s90
      %s94 = sphi 0, %s93
      %s110 = sphi 0, %s94
    $region4: #{xlstm_lm_forward.3} parent=1 // loop_header_branch
      %15 = sbr.rel (%p13) target = $region8
    $region5: #{xlstm_lm_forward.3} parent=1 // loop_body
      %s17 = ssub.s32 %s12, 1
      %s18 = ssub.s32 %s12, 2
      %s19 = sadd.s32 %s12, 1
      %s20 = ssub.s32 %s12, %s19
      %p21 = scmp.eq.s32.totalorder %s20, 0
      %s23 = sadd.s32 %s22, 1
      %s24 = scalar_select %p21, %s22, %s23
      %p27 = pneg %p21
      %p28 = scmp.eq.s32.totalorder %s12, 1
      %p29 = por %p27, %p28
      %p30 = scmp.ne.s32.totalorder %s22, %s25
      %p31 = scmp.eq.s32.totalorder %s12, 0
      %p32 = por %p30, %p31
      %p33 = scmp.ne.s32.totalorder %s22, %s25
      %p34 = scmp.eq.s32.totalorder %s17, 1
      %p35 = por %p33, %p34
      %p36 = scmp.ne.s32.totalorder %s25, %s26
      %p37 = scmp.eq.s32.totalorder %s17, 0
      %p38 = por %p36, %p37
      %p39 = scmp.ne.s32.totalorder %s25, %s26
      %p40 = scmp.eq.s32.totalorder %s18, 1
      %p41 = por %p39, %p40
      %p43 = scmp.ne.s32.totalorder %s26, %s42
      %p44 = scmp.eq.s32.totalorder %s18, 0
      %p45 = por %p43, %p44
      %s47 = sadd.s32 %s46, 1
      %p50 = scmp.eq.s32.totalorder %s12, 1
      %p51 = scmp.ne.s32.totalorder %s46, %s48
      %p52 = scmp.eq.s32.totalorder %s12, 0
      %p53 = por %p51, %p52
      %p54 = scmp.ne.s32.totalorder %s46, %s48
      %p55 = scmp.eq.s32.totalorder %s17, 1
      %p56 = por %p54, %p55
      %p57 = scmp.ne.s32.totalorder %s48, %s49
      %p58 = scmp.eq.s32.totalorder %s17, 0
      %p59 = por %p57, %p58
      %p60 = scmp.ne.s32.totalorder %s48, %s49
      %p61 = scmp.eq.s32.totalorder %s18, 1
      %p62 = por %p60, %p61
      %p64 = scmp.ne.s32.totalorder %s49, %s63
      %p65 = scmp.eq.s32.totalorder %s18, 0
      %p66 = por %p64, %p65
      %s68 = sadd.s32 %s67, 1
      %p71 = scmp.eq.s32.totalorder %s12, 1
      %p72 = scmp.ne.s32.totalorder %s67, %s69
      %p73 = scmp.eq.s32.totalorder %s12, 0
      %p74 = por %p72, %p73
      %p75 = scmp.ne.s32.totalorder %s67, %s69
      %p76 = scmp.eq.s32.totalorder %s17, 1
      %p77 = por %p75, %p76
      %p78 = scmp.ne.s32.totalorder %s69, %s70
      %p79 = scmp.eq.s32.totalorder %s17, 0
      %p80 = por %p78, %p79
      %p81 = scmp.ne.s32.totalorder %s69, %s70
      %p82 = scmp.eq.s32.totalorder %s18, 1
      %p83 = por %p81, %p82
      %p85 = scmp.ne.s32.totalorder %s70, %s84
      %p86 = scmp.eq.s32.totalorder %s18, 0
      %p87 = por %p85, %p86
      %s88 = ssub.s32 %s12, %s19
      %p89 = scmp.eq.s32.totalorder %s88, 0
      %s91 = sadd.s32 %s90, 1
      %s92 = scalar_select %p89, %s90, %s91
      %p95 = pneg %p89
      %p96 = scmp.eq.s32.totalorder %s12, 1
      %p97 = por %p95, %p96
      %p98 = scmp.ne.s32.totalorder %s90, %s93
      %p99 = scmp.eq.s32.totalorder %s12, 0
      %p100 = por %p98, %p99
      %p101 = scmp.ne.s32.totalorder %s90, %s93
      %p102 = scmp.eq.s32.totalorder %s17, 1
      %p103 = por %p101, %p102
      %p104 = scmp.ne.s32.totalorder %s93, %s94
      %p105 = scmp.eq.s32.totalorder %s17, 0
      %p106 = por %p104, %p105
      %p107 = scmp.ne.s32.totalorder %s93, %s94
      %p108 = scmp.eq.s32.totalorder %s18, 1
      %p109 = por %p107, %p108
      %p111 = scmp.ne.s32.totalorder %s94, %s110
      %p112 = scmp.eq.s32.totalorder %s18, 0
      %p113 = por %p111, %p112
      %p114 = scmp.le.s32.totalorder 1, %s12
      %p115 = scmp.lt.s32.totalorder %s12, 3
      %p116 = pnand %p114, %p115
      %p117 = pneg %p116
      // Predicated region
      $region9: #{xlstm_lm_forward.3} parent=5 // pred_check
        _
      $region10: #{xlstm_lm_forward.3} parent=5 // pred_check_branch
        %119 = sbr.rel (%p116) target = $region12
      $region11: #{xlstm_lm_forward.3} parent=5 // pred_region
        %s120 = ssub.s32 %s12, 1
        // Predicated region
        $region13: #{xlstm_lm_forward.3} parent=11 // pred_check
          %p121 = pneg %p59
        $region14: #{xlstm_lm_forward.3} parent=11 // pred_check_branch
          %123 = sbr.rel (%p121) target = $region16
        $region15: #{xlstm_lm_forward.3} parent=11 // pred_region
          _
        $region16: #{xlstm_lm_forward.3} parent=11 // pred_fallthru
          _
        // Predicated region
        $region17: #{xlstm_lm_forward.3} parent=11 // pred_check
          %p124 = pneg %p80
        $region18: #{xlstm_lm_forward.3} parent=11 // pred_check_branch
          %126 = sbr.rel (%p124) target = $region20
        $region19: #{xlstm_lm_forward.3} parent=11 // pred_region
          _
        $region20: #{xlstm_lm_forward.3} parent=11 // pred_fallthru
          _
      $region12: #{xlstm_lm_forward.3} parent=5 // pred_fallthru
        _
      %p127 = scmp.lt.s32.totalorder %s12, 2
      // Predicated region
      $region21: #{xlstm_lm_forward.3} parent=5 // pred_check
        %p128 = pneg %p127
      $region22: #{xlstm_lm_forward.3} parent=5 // pred_check_branch
        %130 = sbr.rel (%p128) target = $region24
      $region23: #{xlstm_lm_forward.3} parent=5 // pred_region
        // Predicated region
        $region25: #{xlstm_lm_forward.3} parent=23 // pred_check
          %p131 = pneg %p32
        $region26: #{xlstm_lm_forward.3} parent=23 // pred_check_branch
          %133 = sbr.rel (%p131) target = $region28
        $region27: #{xlstm_lm_forward.3} parent=23 // pred_region
          %p134 = scmp.lt.s32.totalorder %s12, 1
          %s135 = scalar_select %p134, %s12, 1
          %s136 = smul.addr %s135, 8
          %s137 = scalar_lea.vmem %s0, %s136
        $region28: #{xlstm_lm_forward.3} parent=23 // pred_fallthru
          _
      $region24: #{xlstm_lm_forward.3} parent=5 // pred_fallthru
        _
      %p138 = scmp.le.s32.totalorder 1, %s12
      %p139 = scmp.lt.s32.totalorder %s12, 3
      %p140 = pnand %p138, %p139
      %p141 = pneg %p140
      // Predicated region
      $region29: #{xlstm_lm_forward.3} parent=5 // pred_check
        _
      $region30: #{xlstm_lm_forward.3} parent=5 // pred_check_branch
        %143 = sbr.rel (%p140) target = $region32
      $region31: #{xlstm_lm_forward.3} parent=5 // pred_region
        %s144 = ssub.s32 %s12, 1
        %p145 = scmp.lt.s32.totalorder %s17, 1
        %s146 = scalar_select %p145, %s17, 1
        %s147 = smul.addr %s146, 8
        %s148 = scalar_lea.vmem %s0, %s147
        %p149 = pneg %p38
        %p150 = pneg %p35
        %p151 = pneg %p59
        %p152 = pneg %p56
        %p153 = pneg %p80
        %p154 = pneg %p77
        %p155 = pneg %p106
        %p156 = pneg %p103
        %s157 = sand.u32 %s93, 1
        %s158 = scalar_lea.sflag [#allocation3], %s157
        %s159 = sand.u32 %s93, 1
        %s160 = smul.addr %s159, 8
        %s161 = scalar_lea.vmem [#allocation2], %s160
        %p162 = scmp.lt.s32.totalorder %s17, 1
        %s163 = scalar_select %p162, %s17, 1
        %s164 = smul.addr %s163, 8
        %s165 = scalar_lea.vmem %s0, %s164
        %v167 = vld [vmem:[%s165] sm:$0xff]
        %v168 = vld [vmem:[%s1] sm:$0x1]
        %vm169 = vcmask 261120
        %v170 = vsel %vm169, %v167, 0.0
        %171 = vadd.xlane.f32.xlu0 %v170
        %v172 = vpop.xlane.xlu0 %171
        %v173 = vrcp.pop 32.0
        %v174 = vmul.f32 %v172, %v173
        %v175 = vsub.f32 %v167, %v174
        %v176 = vmul.f32 %v175, %v175
        %v177 = vsel %vm169, %v176, 0.0
        %178 = vadd.xlane.f32.xlu0 %v177
        %v179 = vpop.xlane.xlu0 %178
        %v180 = vmul.f32 %v179, %v173
        %v181 = vadd.f32 %v180, 1e-05
        %v182 = vrsqrt.pop %v181
        %v183 = vmul.f32 %v175, %v182
        %v185 = vlaneseq
        %v186 = vshrl.u32 %v185, 7
        %v187 = vsub.s32 0, %v186
        %v188 = vrot.slane %v168, %v187
        %v190 = vmul.f32 %v183, %v188
        %v191 = vpack.c.bf16 %v190, %v190
        %v192 = vld [vmem:[%s2] sm:$0xf]
        %v193 = vld [vmem:[%s2 + $0x4] sm:$0xf]
        %v194 = vld [vmem:[%s2 + $0x8] sm:$0xf]
        %v195 = vld [vmem:[%s2 + $0xc] sm:$0xf]
        %v200 = vunpack.c.l.b16 %v192
        %v201 = vunpack.c.l.b16 %v193
        %v202 = vunpack.c.l.b16 %v194
        %v203 = vunpack.c.l.b16 %v195
        %v204 = vpack.c.b16 %v201, %v200
        %v205 = vpack.c.b16 %v203, %v202
        %v209 = vsel %vm169, %v191, 0
        %211 = vmatprep.subr.bf16.mxu0 0
        %212 = vmatpush1.bf16.msra.mxu0 %v204
        %213 = vmatprep.subr.bf16.mxu0 0
        %214 = vmatpush1.bf16.msra.mxu0 %v205
        %215 = vmatprep.subr.bf16.mxu0 0
        %216 = vmatpush1.bf16.msra.mxu0 0
        %217 = vmatprep.subr.bf16.mxu0 0
        %218 = vmatpush1.bf16.msra.mxu0 0
        %219 = vmatprep.subr.bf16.mxu0 0
        %220 = vmatpush1.bf16.msra.mxu0 0
        %221 = vmatprep.subr.bf16.mxu0 0
        %222 = vmatpush1.bf16.msra.mxu0 0
        %223 = vmatprep.subr.bf16.mxu0 0
        %224 = vmatpush1.bf16.msra.mxu0 0
        %225 = vmatprep.subr.bf16.mxu0 0
        %226 = vmatpush1.bf16.msra.mxu0 0
        %227 = vmatprep.subr.bf16.mxu0 0
        %228 = vmatpush1.bf16.msra.mxu0 0
        %229 = vmatprep.subr.bf16.mxu0 0
        %230 = vmatpush1.bf16.msra.mxu0 0
        %231 = vmatprep.subr.bf16.mxu0 0
        %232 = vmatpush1.bf16.msra.mxu0 0
        %233 = vmatprep.subr.bf16.mxu0 0
        %234 = vmatpush1.bf16.msra.mxu0 0
        %235 = vmatprep.subr.bf16.mxu0 0
        %236 = vmatpush1.bf16.msra.mxu0 0
        %237 = vmatprep.subr.bf16.mxu0 0
        %238 = vmatpush1.bf16.msra.mxu0 0
        %239 = vmatprep.subr.bf16.mxu0 0
        %240 = vmatpush1.bf16.msra.mxu0 0
        %241 = vmatprep.subr.bf16.mxu0 0
        %242 = vmatpush1.bf16.msra.mxu0 0
        %243 = vmatprep.mubr.bf16.mxu0 0
        %244 = vmatmul.mubr.bf16.gmra.mrb[0].mxu0 %v209
        %v245 = vpop.f32.mrb[0].mxu0
        %v246 = vadd.f32 0.0, %v245
        %v247 = vpop.f32.mrb[0].mxu0
        %v248 = vpop.f32.mrb[0].mxu0
        %v249 = vpop.f32.mrb[0].mxu0
        %250 = vdwg.mxu0
        %vm251 = vcmask 523264
        %252 = vst.msk [vmem:[%s161] sm:$0xff] %vm251, %v246
        %s253 = sand.u32 %s93, 1
        %s254 = scalar_lea.sflag [#allocation3], %s253
        %s255 = sand.u32 %s93, 1
        %s256 = smul.addr %s255, 8
        %s257 = scalar_lea.vmem [#allocation2], %s256
        // Predicated region
        $region33: #{xlstm_lm_forward.3} parent=31 // pred_check
          %p258 = pneg %p103
        $region34: #{xlstm_lm_forward.3} parent=31 // pred_check_branch
          %260 = sbr.rel (%p258) target = $region36
        $region35: #{xlstm_lm_forward.3} parent=31 // pred_region
          %s262 = ssub.s32 128, 128
          %263 = vsyncadd %s254, %s262
          %s264 = smul.addr %s17, 128
          %s265 = scalar_lea.hbm %s3, %s264
          %s267 = sshll.u32 %s257, 4
          %s268 = int_to_ptr.vmem [resolvable:$true] %s267
          %270 = dma.vmem_to_hbm [thread:$0]  %s268, 128, %s265, %s254
        $region36: #{xlstm_lm_forward.3} parent=31 // pred_fallthru
          _
      $region32: #{xlstm_lm_forward.3} parent=5 // pred_fallthru
        _
      %p271 = scmp.le.s32.totalorder 2, %s12
      // Predicated region
      $region37: #{xlstm_lm_forward.3} parent=5 // pred_check
        %p272 = pneg %p271
      $region38: #{xlstm_lm_forward.3} parent=5 // pred_check_branch
        %274 = sbr.rel (%p272) target = $region40
      $region39: #{xlstm_lm_forward.3} parent=5 // pred_region
        %s275 = ssub.s32 %s12, 2
        // Predicated region
        $region41: #{xlstm_lm_forward.3} parent=39 // pred_check
          %p276 = pneg %p109
        $region42: #{xlstm_lm_forward.3} parent=39 // pred_check_branch
          %278 = sbr.rel (%p276) target = $region44
        $region43: #{xlstm_lm_forward.3} parent=39 // pred_region
          %s279 = sand.u32 %s94, 1
          %s280 = scalar_lea.sflag [#allocation3], %s279
          %s281 = sand.u32 %s94, 1
          %s282 = smul.addr %s281, 8
          %s283 = scalar_lea.vmem [#allocation2], %s282
          %284 = dma.done %s280, 128
        $region44: #{xlstm_lm_forward.3} parent=39 // pred_fallthru
          _
      $region40: #{xlstm_lm_forward.3} parent=5 // pred_fallthru
        _
    $region6: #{xlstm_lm_forward.3} parent=1 // loop_footer
      %s16 = sadd.s32 1, %s12
    $region7: #{xlstm_lm_forward.3} parent=1 // loop_footer_branch
      %11 = sbr.rel target = $region3
    $region8: #{xlstm_lm_forward.3} parent=1 // loop_exit
      _
    %285 = vsyncpa [#allocation3], 1
    %s286 = scalar_lea.sflag [#allocation3], 1
    %287 = vsyncpa %s286, 1

// kernel: xlstm_lm_forward.2
$region0: #{xlstm_lm_forward.2}
  #allocation0 [shape = 'u32[]', space=smem, size = 0x4, offset = 0x4, fixed_abs, tag = 'smem constant byte address 0x4 - core index']
  #allocation1 [shape = 'u32[144,128]{1,0:T(1,128)}', space=vmem, size = 0x12000, scoped, tag = 'internal scratch']
  #allocation2 [shape = 'f32[8,32]{1,0:T(8,128)}', space=vmem, size = 0x1000, scoped, tag = 'scratch operand']
  #allocation3 [shape = 'f32[8,8]{1,0:T(8,128)}', space=vmem, size = 0x1000, scoped, tag = 'scratch operand']
  %s0 = inlined_call_operand.vmem [shape: f32[2,8,32], index: 0, kind: input, shape index: {}]
  %s1 = inlined_call_operand.vmem [shape: f32[2,1,32], index: 1, kind: input, shape index: {}]
  %s2 = inlined_call_operand.vmem [shape: bf16[2,32,128], index: 2, kind: input, shape index: {}]
  %s3 = inlined_call_operand.vmem [shape: f32[2,4,64], index: 3, kind: input, shape index: {}]
  %s4 = inlined_call_operand.vmem [shape: f32[2,1,64], index: 4, kind: input, shape index: {}]
  %s5 = inlined_call_operand.vmem [shape: bf16[2,64,136], index: 5, kind: input, shape index: {}]
  %s6 = inlined_call_operand.vmem [shape: bf16[2,64,72], index: 6, kind: input, shape index: {}]
  %s7 = inlined_call_operand.vmem [shape: f32[2,1,8], index: 7, kind: input, shape index: {}]
  %s8 = inlined_call_operand.vmem [shape: f32[2,1,64], index: 8, kind: input, shape index: {}]
  %s9 = inlined_call_operand.vmem [shape: f32[2,1,64], index: 9, kind: input, shape index: {}]
  %s10 = inlined_call_operand.vmem [shape: bf16[2,64,32], index: 10, kind: input, shape index: {}]
  %s11 = inlined_call_operand.vmem [shape: f32[2,8,32], index: 11, kind: output, shape index: {}]
  %s12 = sld [smem:[#allocation0]]
  $region85: #{xlstm_lm_forward.2} parent=0
    _
  %s14 = ssub.s32 1, %s12
  %s15 = scalar_select 0, %s14, %s12
  loop: start=0, step=1, limit=6
  $region2: #{xlstm_lm_forward.2} parent=0 // loop_pre_header
    _
  $region3: #{xlstm_lm_forward.2} parent=0 // loop_header
    %s17 = sphi 0, %s21
    %p18 = scmp.ge.s32.totalorder %s17, 6
    %s24 = sphi 0, %s36
    %s25 = sphi 0, %s32
    %s26 = sphi 0, %s24
    %s27 = sphi 0, %s25
    %s28 = sphi 0, %s26
    %s29 = sphi 0, %s27
    %s39 = sphi 0, %s41
    %s42 = sphi 0, %s39
    %s43 = sphi 0, %s42
    %s59 = sphi 0, %s43
    %s65 = sphi 0, %s67
    %s68 = sphi 0, %s65
    %s69 = sphi 0, %s68
    %s85 = sphi 0, %s69
    %s91 = sphi 0, %s93
    %s94 = sphi 0, %s91
    %s95 = sphi 0, %s94
    %s111 = sphi 0, %s95
    %s117 = sphi 0, %s119
    %s120 = sphi 0, %s117
    %s121 = sphi 0, %s120
    %s137 = sphi 0, %s121
    %s143 = sphi 0, %s145
    %s146 = sphi 0, %s143
    %s147 = sphi 0, %s146
    %s163 = sphi 0, %s147
    %s169 = sphi 0, %s171
    %s172 = sphi 0, %s169
    %s173 = sphi 0, %s172
    %s189 = sphi 0, %s173
    %s195 = sphi 0, %s197
    %s198 = sphi 0, %s195
    %s199 = sphi 0, %s198
    %s215 = sphi 0, %s199
    %s221 = sphi 0, %s223
    %s224 = sphi 0, %s221
    %s225 = sphi 0, %s224
    %s241 = sphi 0, %s225
    %s247 = sphi 0, %s249
    %s250 = sphi 0, %s247
    %s251 = sphi 0, %s250
    %s267 = sphi 0, %s251
    %s273 = sphi 0, %s275
    %s276 = sphi 0, %s273
    %s277 = sphi 0, %s276
    %s293 = sphi 0, %s277
    %s299 = sphi 0, %s301
    %s302 = sphi 0, %s299
    %s303 = sphi 0, %s302
    %s319 = sphi 0, %s303
    %s325 = sphi 0, %s327
    %s328 = sphi 0, %s325
    %s329 = sphi 0, %s328
    %s345 = sphi 0, %s329
  $region4: #{xlstm_lm_forward.2} parent=0 // loop_header_branch
    %20 = sbr.rel (%p18) target = $region8
  $region5: #{xlstm_lm_forward.2} parent=0 // loop_body
    %s22 = ssub.s32 %s17, 1
    %s23 = ssub.s32 %s17, 2
    %s30 = sadd.s32 1, %s25
    %p31 = scmp.ge.s32.totalorder %s30, 2
    %s32 = scalar_select %p31, 0, %s30
    %s33 = sadd.s32 1, %s24
    %s34 = scalar_select %p31, %s33, %s24
    %p35 = scmp.ge.s32.totalorder %s34, 2
    %s36 = scalar_select %p35, 0, %s34
    %s37 = ssub.s32 %s24, %s36
    %p38 = scmp.eq.s32.totalorder %s37, 0
    %s40 = sadd.s32 %s39, 1
    %s41 = scalar_select %p38, %s39, %s40
    %p44 = pneg %p38
    %p45 = scmp.eq.s32.totalorder %s17, 3
    %p46 = por %p44, %p45
    %p47 = scmp.ne.s32.totalorder %s39, %s42
    %p48 = scmp.eq.s32.totalorder %s17, 0
    %p49 = por %p47, %p48
    %p50 = scmp.ne.s32.totalorder %s39, %s42
    %p51 = scmp.eq.s32.totalorder %s22, 3
    %p52 = por %p50, %p51
    %p53 = scmp.ne.s32.totalorder %s42, %s43
    %p54 = scmp.eq.s32.totalorder %s22, 0
    %p55 = por %p53, %p54
    %p56 = scmp.ne.s32.totalorder %s42, %s43
    %p57 = scmp.eq.s32.totalorder %s23, 3
    %p58 = por %p56, %p57
    %p60 = scmp.ne.s32.totalorder %s43, %s59
    %p61 = scmp.eq.s32.totalorder %s23, 0
    %p62 = por %p60, %p61
    %s63 = ssub.s32 %s25, %s32
    %p64 = scmp.eq.s32.totalorder %s63, 0
    %s66 = sadd.s32 %s65, 1
    %s67 = scalar_select %p64, %s65, %s66
    %p70 = pneg %p64
    %p71 = scmp.eq.s32.totalorder %s17, 3
    %p72 = por %p70, %p71
    %p73 = scmp.ne.s32.totalorder %s65, %s68
    %p74 = scmp.eq.s32.totalorder %s17, 0
    %p75 = por %p73, %p74
    %p76 = scmp.ne.s32.totalorder %s65, %s68
    %p77 = scmp.eq.s32.totalorder %s22, 3
    %p78 = por %p76, %p77
    %p79 = scmp.ne.s32.totalorder %s68, %s69
    %p80 = scmp.eq.s32.totalorder %s22, 0
    %p81 = por %p79, %p80
    %p82 = scmp.ne.s32.totalorder %s68, %s69
    %p83 = scmp.eq.s32.totalorder %s23, 3
    %p84 = por %p82, %p83
    %p86 = scmp.ne.s32.totalorder %s69, %s85
    %p87 = scmp.eq.s32.totalorder %s23, 0
    %p88 = por %p86, %p87
    %s89 = ssub.s32 %s25, %s32
    %p90 = scmp.eq.s32.totalorder %s89, 0
    %s92 = sadd.s32 %s91, 1
    %s93 = scalar_select %p90, %s91, %s92
    %p96 = pneg %p90
    %p97 = scmp.eq.s32.totalorder %s17, 3
    %p98 = por %p96, %p97
    %p99 = scmp.ne.s32.totalorder %s91, %s94
    %p100 = scmp.eq.s32.totalorder %s17, 0
    %p101 = por %p99, %p100
    %p102 = scmp.ne.s32.totalorder %s91, %s94
    %p103 = scmp.eq.s32.totalorder %s22, 3
    %p104 = por %p102, %p103
    %p105 = scmp.ne.s32.totalorder %s94, %s95
    %p106 = scmp.eq.s32.totalorder %s22, 0
    %p107 = por %p105, %p106
    %p108 = scmp.ne.s32.totalorder %s94, %s95
    %p109 = scmp.eq.s32.totalorder %s23, 3
    %p110 = por %p108, %p109
    %p112 = scmp.ne.s32.totalorder %s95, %s111
    %p113 = scmp.eq.s32.totalorder %s23, 0
    %p114 = por %p112, %p113
    %s115 = ssub.s32 %s25, %s32
    %p116 = scmp.eq.s32.totalorder %s115, 0
    %s118 = sadd.s32 %s117, 1
    %s119 = scalar_select %p116, %s117, %s118
    %p122 = pneg %p116
    %p123 = scmp.eq.s32.totalorder %s17, 3
    %p124 = por %p122, %p123
    %p125 = scmp.ne.s32.totalorder %s117, %s120
    %p126 = scmp.eq.s32.totalorder %s17, 0
    %p127 = por %p125, %p126
    %p128 = scmp.ne.s32.totalorder %s117, %s120
    %p129 = scmp.eq.s32.totalorder %s22, 3
    %p130 = por %p128, %p129
    %p131 = scmp.ne.s32.totalorder %s120, %s121
    %p132 = scmp.eq.s32.totalorder %s22, 0
    %p133 = por %p131, %p132
    %p134 = scmp.ne.s32.totalorder %s120, %s121
    %p135 = scmp.eq.s32.totalorder %s23, 3
    %p136 = por %p134, %p135
    %p138 = scmp.ne.s32.totalorder %s121, %s137
    %p139 = scmp.eq.s32.totalorder %s23, 0
    %p140 = por %p138, %p139
    %s141 = ssub.s32 %s25, %s32
    %p142 = scmp.eq.s32.totalorder %s141, 0
    %s144 = sadd.s32 %s143, 1
    %s145 = scalar_select %p142, %s143, %s144
    %p148 = pneg %p142
    %p149 = scmp.eq.s32.totalorder %s17, 3
    %p150 = por %p148, %p149
    %p151 = scmp.ne.s32.totalorder %s143, %s146
    %p152 = scmp.eq.s32.totalorder %s17, 0
    %p153 = por %p151, %p152
    %p154 = scmp.ne.s32.totalorder %s143, %s146
    %p155 = scmp.eq.s32.totalorder %s22, 3
    %p156 = por %p154, %p155
    %p157 = scmp.ne.s32.totalorder %s146, %s147
    %p158 = scmp.eq.s32.totalorder %s22, 0
    %p159 = por %p157, %p158
    %p160 = scmp.ne.s32.totalorder %s146, %s147
    %p161 = scmp.eq.s32.totalorder %s23, 3
    %p162 = por %p160, %p161
    %p164 = scmp.ne.s32.totalorder %s147, %s163
    %p165 = scmp.eq.s32.totalorder %s23, 0
    %p166 = por %p164, %p165
    %s167 = ssub.s32 %s25, %s32
    %p168 = scmp.eq.s32.totalorder %s167, 0
    %s170 = sadd.s32 %s169, 1
    %s171 = scalar_select %p168, %s169, %s170
    %p174 = pneg %p168
    %p175 = scmp.eq.s32.totalorder %s17, 3
    %p176 = por %p174, %p175
    %p177 = scmp.ne.s32.totalorder %s169, %s172
    %p178 = scmp.eq.s32.totalorder %s17, 0
    %p179 = por %p177, %p178
    %p180 = scmp.ne.s32.totalorder %s169, %s172
    %p181 = scmp.eq.s32.totalorder %s22, 3
    %p182 = por %p180, %p181
    %p183 = scmp.ne.s32.totalorder %s172, %s173
    %p184 = scmp.eq.s32.totalorder %s22, 0
    %p185 = por %p183, %p184
    %p186 = scmp.ne.s32.totalorder %s172, %s173
    %p187 = scmp.eq.s32.totalorder %s23, 3
    %p188 = por %p186, %p187
    %p190 = scmp.ne.s32.totalorder %s173, %s189
    %p191 = scmp.eq.s32.totalorder %s23, 0
    %p192 = por %p190, %p191
    %s193 = ssub.s32 %s25, %s32
    %p194 = scmp.eq.s32.totalorder %s193, 0
    %s196 = sadd.s32 %s195, 1
    %s197 = scalar_select %p194, %s195, %s196
    %p200 = pneg %p194
    %p201 = scmp.eq.s32.totalorder %s17, 3
    %p202 = por %p200, %p201
    %p203 = scmp.ne.s32.totalorder %s195, %s198
    %p204 = scmp.eq.s32.totalorder %s17, 0
    %p205 = por %p203, %p204
    %p206 = scmp.ne.s32.totalorder %s195, %s198
    %p207 = scmp.eq.s32.totalorder %s22, 3
    %p208 = por %p206, %p207
    %p209 = scmp.ne.s32.totalorder %s198, %s199
    %p210 = scmp.eq.s32.totalorder %s22, 0
    %p211 = por %p209, %p210
    %p212 = scmp.ne.s32.totalorder %s198, %s199
    %p213 = scmp.eq.s32.totalorder %s23, 3
    %p214 = por %p212, %p213
    %p216 = scmp.ne.s32.totalorder %s199, %s215
    %p217 = scmp.eq.s32.totalorder %s23, 0
    %p218 = por %p216, %p217
    %s219 = ssub.s32 %s25, %s32
    %p220 = scmp.eq.s32.totalorder %s219, 0
    %s222 = sadd.s32 %s221, 1
    %s223 = scalar_select %p220, %s221, %s222
    %p226 = pneg %p220
    %p227 = scmp.eq.s32.totalorder %s17, 3
    %p228 = por %p226, %p227
    %p229 = scmp.ne.s32.totalorder %s221, %s224
    %p230 = scmp.eq.s32.totalorder %s17, 0
    %p231 = por %p229, %p230
    %p232 = scmp.ne.s32.totalorder %s221, %s224
    %p233 = scmp.eq.s32.totalorder %s22, 3
    %p234 = por %p232, %p233
    %p235 = scmp.ne.s32.totalorder %s224, %s225
    %p236 = scmp.eq.s32.totalorder %s22, 0
    %p237 = por %p235, %p236
    %p238 = scmp.ne.s32.totalorder %s224, %s225
    %p239 = scmp.eq.s32.totalorder %s23, 3
    %p240 = por %p238, %p239
    %p242 = scmp.ne.s32.totalorder %s225, %s241
    %p243 = scmp.eq.s32.totalorder %s23, 0
    %p244 = por %p242, %p243
    %s245 = ssub.s32 %s25, %s32
    %p246 = scmp.eq.s32.totalorder %s245, 0
    %s248 = sadd.s32 %s247, 1
    %s249 = scalar_select %p246, %s247, %s248
    %p252 = pneg %p246
    %p253 = scmp.eq.s32.totalorder %s17, 3
    %p254 = por %p252, %p253
    %p255 = scmp.ne.s32.totalorder %s247, %s250
    %p256 = scmp.eq.s32.totalorder %s17, 0
    %p257 = por %p255, %p256
    %p258 = scmp.ne.s32.totalorder %s247, %s250
    %p259 = scmp.eq.s32.totalorder %s22, 3
    %p260 = por %p258, %p259
    %p261 = scmp.ne.s32.totalorder %s250, %s251
    %p262 = scmp.eq.s32.totalorder %s22, 0
    %p263 = por %p261, %p262
    %p264 = scmp.ne.s32.totalorder %s250, %s251
    %p265 = scmp.eq.s32.totalorder %s23, 3
    %p266 = por %p264, %p265
    %p268 = scmp.ne.s32.totalorder %s251, %s267
    %p269 = scmp.eq.s32.totalorder %s23, 0
    %p270 = por %p268, %p269
    %s271 = ssub.s32 %s25, %s32
    %p272 = scmp.eq.s32.totalorder %s271, 0
    %s274 = sadd.s32 %s273, 1
    %s275 = scalar_select %p272, %s273, %s274
    %p278 = pneg %p272
    %p279 = scmp.eq.s32.totalorder %s17, 3
    %p280 = por %p278, %p279
    %p281 = scmp.ne.s32.totalorder %s273, %s276
    %p282 = scmp.eq.s32.totalorder %s17, 0
    %p283 = por %p281, %p282
    %p284 = scmp.ne.s32.totalorder %s273, %s276
    %p285 = scmp.eq.s32.totalorder %s22, 3
    %p286 = por %p284, %p285
    %p287 = scmp.ne.s32.totalorder %s276, %s277
    %p288 = scmp.eq.s32.totalorder %s22, 0
    %p289 = por %p287, %p288
    %p290 = scmp.ne.s32.totalorder %s276, %s277
    %p291 = scmp.eq.s32.totalorder %s23, 3
    %p292 = por %p290, %p291
    %p294 = scmp.ne.s32.totalorder %s277, %s293
    %p295 = scmp.eq.s32.totalorder %s23, 0
    %p296 = por %p294, %p295
    %s297 = ssub.s32 %s25, %s32
    %p298 = scmp.eq.s32.totalorder %s297, 0
    %s300 = sadd.s32 %s299, 1
    %s301 = scalar_select %p298, %s299, %s300
    %p304 = pneg %p298
    %p305 = scmp.eq.s32.totalorder %s17, 3
    %p306 = por %p304, %p305
    %p307 = scmp.ne.s32.totalorder %s299, %s302
    %p308 = scmp.eq.s32.totalorder %s17, 0
    %p309 = por %p307, %p308
    %p310 = scmp.ne.s32.totalorder %s299, %s302
    %p311 = scmp.eq.s32.totalorder %s22, 3
    %p312 = por %p310, %p311
    %p313 = scmp.ne.s32.totalorder %s302, %s303
    %p314 = scmp.eq.s32.totalorder %s22, 0
    %p315 = por %p313, %p314
    %p316 = scmp.ne.s32.totalorder %s302, %s303
    %p317 = scmp.eq.s32.totalorder %s23, 3
    %p318 = por %p316, %p317
    %p320 = scmp.ne.s32.totalorder %s303, %s319
    %p321 = scmp.eq.s32.totalorder %s23, 0
    %p322 = por %p320, %p321
    %s323 = ssub.s32 %s24, %s36
    %p324 = scmp.eq.s32.totalorder %s323, 0
    %s326 = sadd.s32 %s325, 1
    %s327 = scalar_select %p324, %s325, %s326
    %p330 = pneg %p324
    %p331 = scmp.eq.s32.totalorder %s17, 3
    %p332 = por %p330, %p331
    %p333 = scmp.ne.s32.totalorder %s325, %s328
    %p334 = scmp.eq.s32.totalorder %s17, 0
    %p335 = por %p333, %p334
    %p336 = scmp.ne.s32.totalorder %s325, %s328
    %p337 = scmp.eq.s32.totalorder %s22, 3
    %p338 = por %p336, %p337
    %p339 = scmp.ne.s32.totalorder %s328, %s329
    %p340 = scmp.eq.s32.totalorder %s22, 0
    %p341 = por %p339, %p340
    %p342 = scmp.ne.s32.totalorder %s328, %s329
    %p343 = scmp.eq.s32.totalorder %s23, 3
    %p344 = por %p342, %p343
    %p346 = scmp.ne.s32.totalorder %s329, %s345
    %p347 = scmp.eq.s32.totalorder %s23, 0
    %p348 = por %p346, %p347
    %p349 = scmp.le.s32.totalorder 1, %s17
    %p350 = scmp.lt.s32.totalorder %s17, 5
    %p351 = pnand %p349, %p350
    %p352 = pneg %p351
    // Predicated region
    $region9: #{xlstm_lm_forward.2} parent=5 // pred_check
      _
    $region10: #{xlstm_lm_forward.2} parent=5 // pred_check_branch
      %354 = sbr.rel (%p351) target = $region12
    $region11: #{xlstm_lm_forward.2} parent=5 // pred_region
      %s355 = ssub.s32 %s17, 1
    $region12: #{xlstm_lm_forward.2} parent=5 // pred_fallthru
      _
    %p356 = scmp.lt.s32.totalorder %s17, 4
    // Predicated region
    $region13: #{xlstm_lm_forward.2} parent=5 // pred_check
      %p357 = pneg %p356
    $region14: #{xlstm_lm_forward.2} parent=5 // pred_check_branch
      %359 = sbr.rel (%p357) target = $region16
    $region15: #{xlstm_lm_forward.2} parent=5 // pred_region
      // Predicated region
      $region17: #{xlstm_lm_forward.2} parent=15 // pred_check
        %p360 = pneg %p49
      $region18: #{xlstm_lm_forward.2} parent=15 // pred_check_branch
        %362 = sbr.rel (%p360) target = $region20
      $region19: #{xlstm_lm_forward.2} parent=15 // pred_region
        %p363 = scmp.lt.s32.totalorder %s24, 1
        %s364 = scalar_select %p363, %s24, 1
        %s365 = smul.addr %s364, 8
        %s366 = scalar_lea.vmem %s0, %s365
      $region20: #{xlstm_lm_forward.2} parent=15 // pred_fallthru
        _
      // Predicated region
      $region21: #{xlstm_lm_forward.2} parent=15 // pred_check
        %p367 = pneg %p75
      $region22: #{xlstm_lm_forward.2} parent=15 // pred_check_branch
        %369 = sbr.rel (%p367) target = $region24
      $region23: #{xlstm_lm_forward.2} parent=15 // pred_region
        %p370 = scmp.lt.s32.totalorder %s25, 1
        %s371 = scalar_select %p370, %s25, 1
        %s372 = scalar_lea.vmem %s1, %s371
      $region24: #{xlstm_lm_forward.2} parent=15 // pred_fallthru
        _
      // Predicated region
      $region25: #{xlstm_lm_forward.2} parent=15 // pred_check
        %p373 = pneg %p101
      $region26: #{xlstm_lm_forward.2} parent=15 // pred_check_branch
        %375 = sbr.rel (%p373) target = $region28
      $region27: #{xlstm_lm_forward.2} parent=15 // pred_region
        %p376 = scmp.lt.s32.totalorder %s25, 1
        %s377 = scalar_select %p376, %s25, 1
        %s378 = smul.addr %s377, 4
        %s379 = smul.addr %s378, 4
        %s380 = scalar_lea.vmem %s2, %s379
      $region28: #{xlstm_lm_forward.2} parent=15 // pred_fallthru
        _
      // Predicated region
      $region29: #{xlstm_lm_forward.2} parent=15 // pred_check
        %p381 = pneg %p127
      $region30: #{xlstm_lm_forward.2} parent=15 // pred_check_branch
        %383 = sbr.rel (%p381) target = $region32
      $region31: #{xlstm_lm_forward.2} parent=15 // pred_region
        %p384 = scmp.lt.s32.totalorder %s25, 1
        %s385 = scalar_select %p384, %s25, 1
        %s386 = smul.addr %s385, 4
        %s387 = scalar_lea.vmem %s3, %s386
      $region32: #{xlstm_lm_forward.2} parent=15 // pred_fallthru
        _
      // Predicated region
      $region33: #{xlstm_lm_forward.2} parent=15 // pred_check
        %p388 = pneg %p153
      $region34: #{xlstm_lm_forward.2} parent=15 // pred_check_branch
        %390 = sbr.rel (%p388) target = $region36
      $region35: #{xlstm_lm_forward.2} parent=15 // pred_region
        %p391 = scmp.lt.s32.totalorder %s25, 1
        %s392 = scalar_select %p391, %s25, 1
        %s393 = scalar_lea.vmem %s4, %s392
      $region36: #{xlstm_lm_forward.2} parent=15 // pred_fallthru
        _
      // Predicated region
      $region37: #{xlstm_lm_forward.2} parent=15 // pred_check
        %p394 = pneg %p179
      $region38: #{xlstm_lm_forward.2} parent=15 // pred_check_branch
        %396 = sbr.rel (%p394) target = $region40
      $region39: #{xlstm_lm_forward.2} parent=15 // pred_region
        %p397 = scmp.lt.s32.totalorder %s25, 1
        %s398 = scalar_select %p397, %s25, 1
        %s399 = smul.addr %s398, 16
        %s400 = smul.addr %s399, 4
        %s401 = scalar_lea.vmem %s5, %s400
      $region40: #{xlstm_lm_forward.2} parent=15 // pred_fallthru
        _
      // Predicated region
      $region41: #{xlstm_lm_forward.2} parent=15 // pred_check
        %p402 = pneg %p205
      $region42: #{xlstm_lm_forward.2} parent=15 // pred_check_branch
        %404 = sbr.rel (%p402) target = $region44
      $region43: #{xlstm_lm_forward.2} parent=15 // pred_region
        %p405 = scmp.lt.s32.totalorder %s25, 1
        %s406 = scalar_select %p405, %s25, 1
        %s407 = smul.addr %s406, 8
        %s408 = smul.addr %s407, 4
        %s409 = scalar_lea.vmem %s6, %s408
      $region44: #{xlstm_lm_forward.2} parent=15 // pred_fallthru
        _
      // Predicated region
      $region45: #{xlstm_lm_forward.2} parent=15 // pred_check
        %p410 = pneg %p231
      $region46: #{xlstm_lm_forward.2} parent=15 // pred_check_branch
        %412 = sbr.rel (%p410) target = $region48
      $region47: #{xlstm_lm_forward.2} parent=15 // pred_region
        %p413 = scmp.lt.s32.totalorder %s25, 1
        %s414 = scalar_select %p413, %s25, 1
        %s415 = scalar_lea.vmem %s7, %s414
      $region48: #{xlstm_lm_forward.2} parent=15 // pred_fallthru
        _
      // Predicated region
      $region49: #{xlstm_lm_forward.2} parent=15 // pred_check
        %p416 = pneg %p257
      $region50: #{xlstm_lm_forward.2} parent=15 // pred_check_branch
        %418 = sbr.rel (%p416) target = $region52
      $region51: #{xlstm_lm_forward.2} parent=15 // pred_region
        %p419 = scmp.lt.s32.totalorder %s25, 1
        %s420 = scalar_select %p419, %s25, 1
        %s421 = scalar_lea.vmem %s8, %s420
      $region52: #{xlstm_lm_forward.2} parent=15 // pred_fallthru
        _
      // Predicated region
      $region53: #{xlstm_lm_forward.2} parent=15 // pred_check
        %p422 = pneg %p283
      $region54: #{xlstm_lm_forward.2} parent=15 // pred_check_branch
        %424 = sbr.rel (%p422) target = $region56
      $region55: #{xlstm_lm_forward.2} parent=15 // pred_region
        %p425 = scmp.lt.s32.totalorder %s25, 1
        %s426 = scalar_select %p425, %s25, 1
        %s427 = scalar_lea.vmem %s9, %s426
      $region56: #{xlstm_lm_forward.2} parent=15 // pred_fallthru
        _
      // Predicated region
      $region57: #{xlstm_lm_forward.2} parent=15 // pred_check
        %p428 = pneg %p309
      $region58: #{xlstm_lm_forward.2} parent=15 // pred_check_branch
        %430 = sbr.rel (%p428) target = $region60
      $region59: #{xlstm_lm_forward.2} parent=15 // pred_region
        %p431 = scmp.lt.s32.totalorder %s25, 1
        %s432 = scalar_select %p431, %s25, 1
        %s433 = smul.addr %s432, 8
        %s434 = smul.addr %s433, 4
        %s435 = scalar_lea.vmem %s10, %s434
      $region60: #{xlstm_lm_forward.2} parent=15 // pred_fallthru
        _
    $region16: #{xlstm_lm_forward.2} parent=5 // pred_fallthru
      _
    %p436 = scmp.le.s32.totalorder 1, %s17
    %p437 = scmp.lt.s32.totalorder %s17, 5
    %p438 = pnand %p436, %p437
    %p439 = pneg %p438
    // Predicated region
    $region61: #{xlstm_lm_forward.2} parent=5 // pred_check
      _
    $region62: #{xlstm_lm_forward.2} parent=5 // pred_check_branch
      %441 = sbr.rel (%p438) target = $region64
    $region63: #{xlstm_lm_forward.2} parent=5 // pred_region
      %s442 = ssub.s32 %s17, 1
      %p443 = scmp.lt.s32.totalorder %s26, 1
      %s444 = scalar_select %p443, %s26, 1
      %s445 = smul.addr %s444, 8
      %s446 = scalar_lea.vmem %s0, %s445
      %p447 = pneg %p55
      %p448 = pneg %p52
      %p449 = scmp.lt.s32.totalorder %s27, 1
      %s450 = scalar_select %p449, %s27, 1
      %s451 = scalar_lea.vmem %s1, %s450
      %p452 = pneg %p81
      %p453 = pneg %p78
      %p454 = scmp.lt.s32.totalorder %s27, 1
      %s455 = scalar_select %p454, %s27, 1
      %s456 = smul.addr %s455, 4
      %s457 = smul.addr %s456, 4
      %s458 = scalar_lea.vmem %s2, %s457
      %p459 = pneg %p107
      %p460 = pneg %p104
      %p461 = scmp.lt.s32.totalorder %s27, 1
      %s462 = scalar_select %p461, %s27, 1
      %s463 = smul.addr %s462, 4
      %s464 = scalar_lea.vmem %s3, %s463
      %p465 = pneg %p133
      %p466 = pneg %p130
      %p467 = scmp.lt.s32.totalorder %s27, 1
      %s468 = scalar_select %p467, %s27, 1
      %s469 = scalar_lea.vmem %s4, %s468
      %p470 = pneg %p159
      %p471 = pneg %p156
      %p472 = scmp.lt.s32.totalorder %s27, 1
      %s473 = scalar_select %p472, %s27, 1
      %s474 = smul.addr %s473, 16
      %s475 = smul.addr %s474, 4
      %s476 = scalar_lea.vmem %s5, %s475
      %p477 = pneg %p185
      %p478 = pneg %p182
      %p479 = scmp.lt.s32.totalorder %s27, 1
      %s480 = scalar_select %p479, %s27, 1
      %s481 = smul.addr %s480, 8
      %s482 = smul.addr %s481, 4
      %s483 = scalar_lea.vmem %s6, %s482
      %p484 = pneg %p211
      %p485 = pneg %p208
      %p486 = scmp.lt.s32.totalorder %s27, 1
      %s487 = scalar_select %p486, %s27, 1
      %s488 = scalar_lea.vmem %s7, %s487
      %p489 = pneg %p237
      %p490 = pneg %p234
      %p491 = scmp.lt.s32.totalorder %s27, 1
      %s492 = scalar_select %p491, %s27, 1
      %s493 = scalar_lea.vmem %s8, %s492
      %p494 = pneg %p263
      %p495 = pneg %p260
      %p496 = scmp.lt.s32.totalorder %s27, 1
      %s497 = scalar_select %p496, %s27, 1
      %s498 = scalar_lea.vmem %s9, %s497
      %p499 = pneg %p289
      %p500 = pneg %p286
      %p501 = scmp.lt.s32.totalorder %s27, 1
      %s502 = scalar_select %p501, %s27, 1
      %s503 = smul.addr %s502, 8
      %s504 = smul.addr %s503, 4
      %s505 = scalar_lea.vmem %s10, %s504
      %p506 = pneg %p315
      %p507 = pneg %p312
      %p508 = pneg %p341
      %p509 = pneg %p338
      %p510 = scmp.lt.s32.totalorder %s26, 1
      %s511 = scalar_select %p510, %s26, 1
      %s512 = smul.addr %s511, 8
      %s513 = scalar_lea.vmem %s11, %s512
      %p514 = scmp.lt.s32.totalorder %s26, 1
      %s515 = scalar_select %p514, %s26, 1
      %s516 = smul.addr %s515, 8
      %s517 = scalar_lea.vmem %s0, %s516
      %p518 = scmp.lt.s32.totalorder %s27, 1
      %s519 = scalar_select %p518, %s27, 1
      %s520 = scalar_lea.vmem %s1, %s519
      %p521 = scmp.lt.s32.totalorder %s27, 1
      %s522 = scalar_select %p521, %s27, 1
      %s523 = smul.addr %s522, 4
      %s524 = smul.addr %s523, 4
      %s525 = scalar_lea.vmem %s2, %s524
      %p526 = scmp.lt.s32.totalorder %s27, 1
      %s527 = scalar_select %p526, %s27, 1
      %s528 = smul.addr %s527, 4
      %s529 = scalar_lea.vmem %s3, %s528
      %p530 = scmp.lt.s32.totalorder %s27, 1
      %s531 = scalar_select %p530, %s27, 1
      %s532 = scalar_lea.vmem %s4, %s531
      %p533 = scmp.lt.s32.totalorder %s27, 1
      %s534 = scalar_select %p533, %s27, 1
      %s535 = smul.addr %s534, 16
      %s536 = smul.addr %s535, 4
      %s537 = scalar_lea.vmem %s5, %s536
      %p538 = scmp.lt.s32.totalorder %s27, 1
      %s539 = scalar_select %p538, %s27, 1
      %s540 = smul.addr %s539, 8
      %s541 = smul.addr %s540, 4
      %s542 = scalar_lea.vmem %s6, %s541
      %p543 = scmp.lt.s32.totalorder %s27, 1
      %s544 = scalar_select %p543, %s27, 1
      %s545 = scalar_lea.vmem %s7, %s544
      %p546 = scmp.lt.s32.totalorder %s27, 1
      %s547 = scalar_select %p546, %s27, 1
      %s548 = scalar_lea.vmem %s8, %s547
      %p549 = scmp.lt.s32.totalorder %s27, 1
      %s550 = scalar_select %p549, %s27, 1
      %s551 = scalar_lea.vmem %s9, %s550
      %p552 = scmp.lt.s32.totalorder %s27, 1
      %s553 = scalar_select %p552, %s27, 1
      %s554 = smul.addr %s553, 8
      %s555 = smul.addr %s554, 4
      %s556 = scalar_lea.vmem %s10, %s555
      %p557 = scmp.lt.s32.totalorder %s26, 1
      %s558 = scalar_select %p557, %s26, 1
      %s559 = smul.addr %s558, 8
      %s560 = scalar_lea.vmem %s11, %s559
      %p562 = scmp.eq.s32.totalorder %s27, 0
      // Predicated region
      $region65: #{xlstm_lm_forward.2} parent=63 // pred_check
        %p563 = pneg %p562
      $region66: #{xlstm_lm_forward.2} parent=63 // pred_check_branch
        %565 = sbr.rel (%p563) target = $region68
      $region67: #{xlstm_lm_forward.2} parent=63 // pred_region
        %v566 = vlaneseq
        %v567 = vshrl.u32 %v566, 7
        %v568 = vlaneseq
        %v569 = vand.u32 %v568, 127
        %vm570 = vcmp.ge.s32.totalorder %v567, %v569
        %v571 = vsel %vm570, 1, 0
        %v572 = vcvt.s32.f32 %v571
        %vm573 = vcmask 64512
        %574 = vst.msk [vmem:[#allocation3] sm:$0xff] %vm573, %v572
        %v575 = vld [vmem:[%s517] sm:$0xff]
        %vm576 = vcmask 261120
        %577 = vst.msk [vmem:[#allocation2] sm:$0xff] %vm576, %v575
      $region68: #{xlstm_lm_forward.2} parent=63 // pred_fallthru
        _
      %v578 = vld [vmem:[#allocation2] sm:$0xff]
      %v579 = vld [vmem:[#allocation3] sm:$0xff]
      %v580 = vld [vmem:[%s520] sm:$0x1]
      %vm581 = vcmask 261120
      %v582 = vsel %vm581, %v578, 0.0
      %583 = vadd.xlane.f32.xlu0 %v582
      %v584 = vpop.xlane.xlu0 %583
      %v585 = vrcp.pop 32.0
      %v586 = vmul.f32 %v584, %v585
      %v587 = vsub.f32 %v578, %v586
      %v588 = vmul.f32 %v587, %v587
      %v589 = vsel %vm581, %v588, 0.0
      %590 = vadd.xlane.f32.xlu0 %v589
      %v591 = vpop.xlane.xlu0 %590
      %v592 = vmul.f32 %v591, %v585
      %v593 = vadd.f32 %v592, 1e-05
      %v594 = vrsqrt.pop %v593
      %v595 = vmul.f32 %v587, %v594
      %v597 = vlaneseq
      %v598 = vshrl.u32 %v597, 7
      %v599 = vsub.s32 0, %v598
      %v600 = vrot.slane %v580, %v599
      %v602 = vmul.f32 %v595, %v600
      %v603 = vpack.c.bf16 %v602, %v602
      %v604 = vld [vmem:[%s525] sm:$0xf]
      %v605 = vld [vmem:[%s525 + $0x4] sm:$0xf]
      %v606 = vld [vmem:[%s525 + $0x8] sm:$0xf]
      %v607 = vld [vmem:[%s525 + $0xc] sm:$0xf]
      %v612 = vunpack.c.l.b16 %v604
      %v613 = vunpack.c.l.b16 %v605
      %v614 = vunpack.c.l.b16 %v606
      %v615 = vunpack.c.l.b16 %v607
      %v616 = vpack.c.b16 %v613, %v612
      %v617 = vpack.c.b16 %v615, %v614
      %v621 = vsel %vm581, %v603, 0
      %623 = vmatprep.subr.bf16.mxu0 0
      %624 = vmatpush1.bf16.msra.mxu0 %v616
      %625 = vmatprep.subr.bf16.mxu0 0
      %626 = vmatpush1.bf16.msra.mxu0 %v617
      %627 = vmatprep.subr.bf16.mxu0 0
      %628 = vmatpush1.bf16.msra.mxu0 0
      %629 = vmatprep.subr.bf16.mxu0 0
      %630 = vmatpush1.bf16.msra.mxu0 0
      %631 = vmatprep.subr.bf16.mxu0 0
      %632 = vmatpush1.bf16.msra.mxu0 0
      %633 = vmatprep.subr.bf16.mxu0 0
      %634 = vmatpush1.bf16.msra.mxu0 0
      %635 = vmatprep.subr.bf16.mxu0 0
      %636 = vmatpush1.bf16.msra.mxu0 0
      %637 = vmatprep.subr.bf16.mxu0 0
      %638 = vmatpush1.bf16.msra.mxu0 0
      %639 = vmatprep.subr.bf16.mxu0 0
      %640 = vmatpush1.bf16.msra.mxu0 0
      %641 = vmatprep.subr.bf16.mxu0 0
      %642 = vmatpush1.bf16.msra.mxu0 0
      %643 = vmatprep.subr.bf16.mxu0 0
      %644 = vmatpush1.bf16.msra.mxu0 0
      %645 = vmatprep.subr.bf16.mxu0 0
      %646 = vmatpush1.bf16.msra.mxu0 0
      %647 = vmatprep.subr.bf16.mxu0 0
      %648 = vmatpush1.bf16.msra.mxu0 0
      %649 = vmatprep.subr.bf16.mxu0 0
      %650 = vmatpush1.bf16.msra.mxu0 0
      %651 = vmatprep.subr.bf16.mxu0 0
      %652 = vmatpush1.bf16.msra.mxu0 0
      %653 = vmatprep.subr.bf16.mxu0 0
      %654 = vmatpush1.bf16.msra.mxu0 0
      %655 = vmatprep.mubr.bf16.mxu0 0
      %656 = vmatmul.mubr.bf16.gmra.mrb[0].mxu0 %v621
      %v657 = vpop.f32.mrb[0].mxu0
      %v658 = vadd.f32 0.0, %v657
      %v659 = vpop.f32.mrb[0].mxu0
      %v660 = vpop.f32.mrb[0].mxu0
      %v661 = vpop.f32.mrb[0].mxu0
      %662 = vdwg.mxu0
      %v663 = vld [vmem:[%s529] sm:$0xf]
      %v664 = vlaneseq
      %v665 = vshrl.u32 %v664, 7
      %v666 = vsub.s32 3, %v665
      %v667 = vrot.slane %v663, %v666
      %v668 = vmul.f32 %v658, %v667
      %v670 = vrot.slane %v658, 5
      %vm672 = vcmask 1042432
      %v673 = vsel %vm672, 0.0, %v670
      %v674 = vlaneseq
      %v675 = vshrl.u32 %v674, 7
      %v676 = vsub.s32 0, %v675
      %v677 = vrot.slane %v663, %v676
      %v678 = vmul.f32 %v673, %v677
      %v679 = vadd.f32 %v668, %v678
      %v680 = vrot.slane %v658, 6
      %vm682 = vcmask 1041408
      %v683 = vsel %vm682, 0.0, %v680
      %v684 = vlaneseq
      %v685 = vshrl.u32 %v684, 7
      %v686 = vsub.s32 1, %v685
      %v687 = vrot.slane %v663, %v686
      %v688 = vmul.f32 %v683, %v687
      %v689 = vadd.f32 %v679, %v688
      %v690 = vrot.slane %v658, 7
      %vm692 = vcmask 1040384
      %v693 = vsel %vm692, 0.0, %v690
      %v694 = vlaneseq
      %v695 = vshrl.u32 %v694, 7
      %v696 = vsub.s32 2, %v695
      %v697 = vrot.slane %v663, %v696
      %v698 = vmul.f32 %v693, %v697
      %v699 = vadd.f32 %v689, %v698
      %v700 = vld [vmem:[%s532] sm:$0x1]
      %v702 = vlaneseq
      %v703 = vshrl.u32 %v702, 7
      %v704 = vsub.s32 0, %v703
      %v705 = vrot.slane %v700, %v704
      %v707 = vadd.f32 %v699, %v705
      %v708 = vxor.u32 %v707, 2147483648
      %v709 = vmul.f32 %v708, 1.442695
      %v710 = vpow.pop %v709
      %v711 = vadd.f32 %v710, 1.0
      %v712 = vrcp.pop %v711
      %v713 = vmul.f32 1.0, %v712
      %v714 = vmul.f32 %v707, %v713
      %v715 = vpack.c.bf16 %v714, %v714
      %v716 = vld [vmem:[%s537] sm:$0xff]
      %v717 = vld [vmem:[%s537 + $0x8] sm:$0xff]
      %v718 = vld [vmem:[%s537 + $0x10] sm:$0xff]
      %v719 = vld [vmem:[%s537 + $0x18] sm:$0xff]
      %v720 = vld [vmem:[%s537 + $0x20] sm:$0xff]
      %v721 = vld [vmem:[%s537 + $0x28] sm:$0xff]
      %v722 = vld [vmem:[%s537 + $0x30] sm:$0xff]
      %v723 = vld [vmem:[%s537 + $0x38] sm:$0xff]
      %v732 = vunpack.c.l.b16 %v716
      %v733 = vunpack.c.h.b16 %v716
      %v734 = vunpack.c.l.b16 %v717
      %v735 = vunpack.c.h.b16 %v717
      %v736 = vunpack.c.l.b16 %v718
      %v737 = vunpack.c.h.b16 %v718
      %v738 = vunpack.c.l.b16 %v719
      %v739 = vunpack.c.h.b16 %v719
      %v740 = vunpack.c.l.b16 %v720
      %v741 = vunpack.c.h.b16 %v720
      %v742 = vunpack.c.l.b16 %v721
      %v743 = vunpack.c.h.b16 %v721
      %v744 = vunpack.c.l.b16 %v722
      %v745 = vunpack.c.h.b16 %v722
      %v746 = vunpack.c.l.b16 %v723
      %v747 = vunpack.c.h.b16 %v723
      %v748 = vpack.c.b16 %v734, %v732
      %v749 = vpack.c.b16 %v735, %v733
      %v750 = vpack.c.b16 %v738, %v736
      %v751 = vpack.c.b16 %v739, %v737
      %v752 = vpack.c.b16 %v742, %v740
      %v753 = vpack.c.b16 %v743, %v741
      %v754 = vpack.c.b16 %v746, %v744
      %v755 = vpack.c.b16 %v747, %v745
      %vm764 = vcmask 523264
      %v766 = vsel %vm764, %v715, 0
      %768 = vmatprep.subr.bf16.mxu0 %v749
      %769 = vmatpush1.bf16.msra.mxu0 %v748
      %770 = vmatprep.subr.bf16.mxu0 %v751
      %771 = vmatpush1.bf16.msra.mxu0 %v750
      %772 = vmatprep.subr.bf16.mxu0 %v753
      %773 = vmatpush1.bf16.msra.mxu0 %v752
      %774 = vmatprep.subr.bf16.mxu0 %v755
      %775 = vmatpush1.bf16.msra.mxu0 %v754
      %776 = vmatprep.subr.bf16.mxu0 0
      %777 = vmatpush1.bf16.msra.mxu0 0
      %778 = vmatprep.subr.bf16.mxu0 0
      %779 = vmatpush1.bf16.msra.mxu0 0
      %780 = vmatprep.subr.bf16.mxu0 0
      %781 = vmatpush1.bf16.msra.mxu0 0
      %782 = vmatprep.subr.bf16.mxu0 0
      %783 = vmatpush1.bf16.msra.mxu0 0
      %784 = vmatprep.subr.bf16.mxu0 0
      %785 = vmatpush1.bf16.msra.mxu0 0
      %786 = vmatprep.subr.bf16.mxu0 0
      %787 = vmatpush1.bf16.msra.mxu0 0
      %788 = vmatprep.subr.bf16.mxu0 0
      %789 = vmatpush1.bf16.msra.mxu0 0
      %790 = vmatprep.subr.bf16.mxu0 0
      %791 = vmatpush1.bf16.msra.mxu0 0
      %792 = vmatprep.subr.bf16.mxu0 0
      %793 = vmatpush1.bf16.msra.mxu0 0
      %794 = vmatprep.subr.bf16.mxu0 0
      %795 = vmatpush1.bf16.msra.mxu0 0
      %796 = vmatprep.subr.bf16.mxu0 0
      %797 = vmatpush1.bf16.msra.mxu0 0
      %798 = vmatprep.subr.bf16.mxu0 0
      %799 = vmatpush1.bf16.msra.mxu0 0
      %800 = vmatprep.mubr.bf16.mxu0 0
      %801 = vmatmul.mubr.bf16.gmra.mrb[0].mxu0 %v766
      %v802 = vpop.f32.mrb[0].mxu0
      %v803 = vadd.f32 0.0, %v802
      %v804 = vpop.f32.mrb[0].mxu0
      %v805 = vadd.f32 0.0, %v804
      %v806 = vpop.f32.mrb[0].mxu0
      %v807 = vpop.f32.mrb[0].mxu0
      %808 = vdwg.mxu0
      %v809 = vpack.c.bf16 %v658, %v658
      %v810 = vld [vmem:[%s542] sm:$0xf]
      %v811 = vld [vmem:[%s542 + $0x4] sm:$0xf]
      %v812 = vld [vmem:[%s542 + $0x8] sm:$0xf]
      %v813 = vld [vmem:[%s542 + $0xc] sm:$0xf]
      %v814 = vld [vmem:[%s542 + $0x10] sm:$0xf]
      %v815 = vld [vmem:[%s542 + $0x14] sm:$0xf]
      %v816 = vld [vmem:[%s542 + $0x18] sm:$0xf]
      %v817 = vld [vmem:[%s542 + $0x1c] sm:$0xf]
      %v826 = vunpack.c.l.b16 %v810
      %v827 = vunpack.c.l.b16 %v811
      %v828 = vunpack.c.l.b16 %v812
      %v829 = vunpack.c.l.b16 %v813
      %v830 = vunpack.c.l.b16 %v814
      %v831 = vunpack.c.l.b16 %v815
      %v832 = vunpack.c.l.b16 %v816
      %v833 = vunpack.c.l.b16 %v817
      %v834 = vpack.c.b16 %v827, %v826
      %v835 = vpack.c.b16 %v829, %v828
      %v836 = vpack.c.b16 %v831, %v830
      %v837 = vpack.c.b16 %v833, %v832
      %v843 = vsel %vm764, %v809, 0
      %845 = vmatprep.subr.bf16.mxu0 0
      %846 = vmatpush1.bf16.msra.mxu0 %v834
      %847 = vmatprep.subr.bf16.mxu0 0
      %848 = vmatpush1.bf16.msra.mxu0 %v835
      %849 = vmatprep.subr.bf16.mxu0 0
      %850 = vmatpush1.bf16.msra.mxu0 %v836
      %851 = vmatprep.subr.bf16.mxu0 0
      %852 = vmatpush1.bf16.msra.mxu0 %v837
      %853 = vmatprep.subr.bf16.mxu0 0
      %854 = vmatpush1.bf16.msra.mxu0 0
      %855 = vmatprep.subr.bf16.mxu0 0
      %856 = vmatpush1.bf16.msra.mxu0 0
      %857 = vmatprep.subr.bf16.mxu0 0
      %858 = vmatpush1.bf16.msra.mxu0 0
      %859 = vmatprep.subr.bf16.mxu0 0
      %860 = vmatpush1.bf16.msra.mxu0 0
      %861 = vmatprep.subr.bf16.mxu0 0
      %862 = vmatpush1.bf16.msra.mxu0 0
      %863 = vmatprep.subr.bf16.mxu0 0
      %864 = vmatpush1.bf16.msra.mxu0 0
      %865 = vmatprep.subr.bf16.mxu0 0
      %866 = vmatpush1.bf16.msra.mxu0 0
      %867 = vmatprep.subr.bf16.mxu0 0
      %868 = vmatpush1.bf16.msra.mxu0 0
      %869 = vmatprep.subr.bf16.mxu0 0
      %870 = vmatpush1.bf16.msra.mxu0 0
      %871 = vmatprep.subr.bf16.mxu0 0
      %872 = vmatpush1.bf16.msra.mxu0 0
      %873 = vmatprep.subr.bf16.mxu0 0
      %874 = vmatpush1.bf16.msra.mxu0 0
      %875 = vmatprep.subr.bf16.mxu0 0
      %876 = vmatpush1.bf16.msra.mxu0 0
      %877 = vmatprep.mubr.bf16.mxu0 0
      %878 = vmatmul.mubr.bf16.gmra.mrb[0].mxu0 %v843
      %v879 = vpop.f32.mrb[0].mxu0
      %v880 = vadd.f32 0.0, %v879
      %v881 = vpop.f32.mrb[0].mxu0
      %v882 = vpop.f32.mrb[0].mxu0
      %v883 = vpop.f32.mrb[0].mxu0
      %884 = vdwg.mxu0
      %886 = vrot.lane.b32.xlu0 %v880, 64
      %v887 = vpop.permute.xlu0 %886
      %v889 = vadd.f32 %v805, %v887
      %v890 = vld [vmem:[%s545] sm:$0x1]
      %v892 = vlaneseq
      %v893 = vshrl.u32 %v892, 7
      %v894 = vsub.s32 0, %v893
      %v895 = vrot.slane %v890, %v894
      %v897 = vadd.f32 %v889, %v895
      %v898 = vsub.f32 0.0, %v897
      %v899 = vmax.f32 %v898, 0.0
      %vm900 = vcmp.ne.f32.partialorder %v898, %v898
      %v901 = vadd.f32 %v898, 0.0
      %v902 = vand.u32 2147483647, %v898
      %v903 = vsub.f32 0.0, %v902
      %v904 = vmul.f32 %v903, 1.442695
      %v905 = vpow.pop %v904
      %v906 = vadd.f32 %v905, 1.0
      %v907 = vlog2.pop %v906
      %v908 = vmul.f32 %v907, 0.6931472
      %v909 = vmul.f32 -0.5, %v905
      %v910 = vadd.f32 %v909, 1.0
      %v911 = vmul.f32 %v910, %v905
      %v912 = vand.u32 2147483647, %v905
      %vm913 = vcmp.lt.f32.partialorder %v912, 0.0004427343
      %v914 = vsel %vm913, %v911, %v908
      %v915 = vadd.f32 %v899, %v914
      %v916 = vsel %vm900, %v901, %v915
      %v917 = vsub.f32 0.0, %v916
      %919 = vrot.lane.b32.xlu0 %v917, 124
      %v920 = vpop.permute.xlu0 %919
      %vm922 = vcmask 64512
      %v924 = vsel %vm922, %v579, 0
      %926 = vmatprep.subr.mxu0 0.0
      %927 = vmatpush1.msra.mxu0 %v920
      %928 = vmatprep.subr.mxu0 0.0
      %929 = vmatpush1.msra.mxu0 0.0
      %930 = vmatprep.subr.mxu0 0.0
      %931 = vmatpush1.msra.mxu0 0.0
      %932 = vmatprep.subr.mxu0 0.0
      %933 = vmatpush1.msra.mxu0 0.0
      %934 = vmatprep.subr.mxu0 0.0
      %935 = vmatpush1.msra.mxu0 0.0
      %936 = vmatprep.subr.mxu0 0.0
      %937 = vmatpush1.msra.mxu0 0.0
      %938 = vmatprep.subr.mxu0 0.0
      %939 = vmatpush1.msra.mxu0 0.0
      %940 = vmatprep.subr.mxu0 0.0
      %941 = vmatpush1.msra.mxu0 0.0
      %942 = vmatprep.subr.mxu0 0.0
      %943 = vmatpush1.msra.mxu0 0.0
      %944 = vmatprep.subr.mxu0 0.0
      %945 = vmatpush1.msra.mxu0 0.0
      %946 = vmatprep.subr.mxu0 0.0
      %947 = vmatpush1.msra.mxu0 0.0
      %948 = vmatprep.subr.mxu0 0.0
      %949 = vmatpush1.msra.mxu0 0.0
      %950 = vmatprep.subr.mxu0 0.0
      %951 = vmatpush1.msra.mxu0 0.0
      %952 = vmatprep.subr.mxu0 0.0
      %953 = vmatpush1.msra.mxu0 0.0
      %954 = vmatprep.subr.mxu0 0.0
      %955 = vmatpush1.msra.mxu0 0.0
      %956 = vmatprep.subr.mxu0 0.0
      %957 = vmatpush1.msra.mxu0 0.0
      %958 = vmatprep.subr.mxu0 0.0
      %959 = vmatpush1.msra.mxu0 0.0
      %960 = vmatprep.subr.mxu0 0.0
      %961 = vmatpush1.msra.mxu0 0.0
      %962 = vmatprep.subr.mxu0 0.0
      %963 = vmatpush1.msra.mxu0 0.0
      %964 = vmatprep.subr.mxu0 0.0
      %965 = vmatpush1.msra.mxu0 0.0
      %966 = vmatprep.subr.mxu0 0.0
      %967 = vmatpush1.msra.mxu0 0.0
      %968 = vmatprep.subr.mxu0 0.0
      %969 = vmatpush1.msra.mxu0 0.0
      %970 = vmatprep.subr.mxu0 0.0
      %971 = vmatpush1.msra.mxu0 0.0
      %972 = vmatprep.subr.mxu0 0.0
      %973 = vmatpush1.msra.mxu0 0.0
      %974 = vmatprep.subr.mxu0 0.0
      %975 = vmatpush1.msra.mxu0 0.0
      %976 = vmatprep.subr.mxu0 0.0
      %977 = vmatpush1.msra.mxu0 0.0
      %978 = vmatprep.subr.mxu0 0.0
      %979 = vmatpush1.msra.mxu0 0.0
      %980 = vmatprep.subr.mxu0 0.0
      %981 = vmatpush1.msra.mxu0 0.0
      %982 = vmatprep.subr.mxu0 0.0
      %983 = vmatpush1.msra.mxu0 0.0
      %984 = vmatprep.subr.mxu0 0.0
      %985 = vmatpush1.msra.mxu0 0.0
      %986 = vmatprep.subr.mxu0 0.0
      %987 = vmatpush1.msra.mxu0 0.0
      %988 = vmatprep.subr.mxu0 0.0
      %989 = vmatpush1.msra.mxu0 0.0
      %990 = vmatprep.mubr.f32.mxu0 0.0
      %991 = vmatmul.mubr.f32.gmra.mrb[0].mxu0 %v924
      %v992 = vpop.f32.mrb[0].mxu0
      %v993 = vadd.f32 0.0, %v992
      %v994 = vpop.f32.mrb[0].mxu0
      %995 = vdwg.mxu0
      %996 = vxpose.xlu0.b32.start [1/16] %v993, 128
      %997 = vxpose.xlu0.b32.cont [2/16] 0.0, 128
      %998 = vxpose.xlu0.b32.cont [3/16] 0.0, 128
      %999 = vxpose.xlu0.b32.cont [4/16] 0.0, 128
      %1000 = vxpose.xlu0.b32.cont [5/16] 0.0, 128
      %1001 = vxpose.xlu0.b32.cont [6/16] 0.0, 128
      %1002 = vxpose.xlu0.b32.cont [7/16] 0.0, 128
      %1003 = vxpose.xlu0.b32.cont [8/16] 0.0, 128
      %1004 = vxpose.xlu0.b32.cont [9/16] 0.0, 128
      %1005 = vxpose.xlu0.b32.cont [10/16] 0.0, 128
      %1006 = vxpose.xlu0.b32.cont [11/16] 0.0, 128
      %1007 = vxpose.xlu0.b32.cont [12/16] 0.0, 128
      %1008 = vxpose.xlu0.b32.cont [13/16] 0.0, 128
      %1009 = vxpose.xlu0.b32.cont [14/16] 0.0, 128
      %1010 = vxpose.xlu0.b32.cont [15/16] 0.0, 128
      %1011 = vxpose.xlu0.b32.end [16/16] 0.0, 128
      %v1012 = vpop.trf.xlu0
      %v1013 = vpop.trf.xlu0
      %v1014 = vpop.trf.xlu0
      %v1015 = vpop.trf.xlu0
      %v1016 = vpop.trf.xlu0
      %v1017 = vpop.trf.xlu0
      %v1018 = vpop.trf.xlu0
      %v1019 = vpop.trf.xlu0
      %v1020 = vpop.trf.xlu0
      %v1021 = vpop.trf.xlu0
      %v1022 = vpop.trf.xlu0
      %v1023 = vpop.trf.xlu0
      %v1024 = vpop.trf.xlu0
      %v1025 = vpop.trf.xlu0
      %v1026 = vpop.trf.xlu0
      %v1027 = vpop.trf.xlu0
      %1028 = vxpose.xlu0.b32.start [1/16] %v897, 128
      %1029 = vxpose.xlu0.b32.cont [2/16] 0.0, 128
      %1030 = vxpose.xlu0.b32.cont [3/16] 0.0, 128
      %1031 = vxpose.xlu0.b32.cont [4/16] 0.0, 128
      %1032 = vxpose.xlu0.b32.cont [5/16] 0.0, 128
      %1033 = vxpose.xlu0.b32.cont [6/16] 0.0, 128
      %1034 = vxpose.xlu0.b32.cont [7/16] 0.0, 128
      %1035 = vxpose.xlu0.b32.cont [8/16] 0.0, 128
      %1036 = vxpose.xlu0.b32.cont [9/16] 0.0, 128
      %1037 = vxpose.xlu0.b32.cont [10/16] 0.0, 128
      %1038 = vxpose.xlu0.b32.cont [11/16] 0.0, 128
      %1039 = vxpose.xlu0.b32.cont [12/16] 0.0, 128
      %1040 = vxpose.xlu0.b32.cont [13/16] 0.0, 128
      %1041 = vxpose.xlu0.b32.cont [14/16] 0.0, 128
      %1042 = vxpose.xlu0.b32.cont [15/16] 0.0, 128
      %1043 = vxpose.xlu0.b32.end [16/16] 0.0, 128
      %v1044 = vpop.trf.xlu0
      %v1045 = vpop.trf.xlu0
      %v1046 = vpop.trf.xlu0
      %v1047 = vpop.trf.xlu0
      %v1048 = vpop.trf.xlu0
      %v1049 = vpop.trf.xlu0
      %v1050 = vpop.trf.xlu0
      %v1051 = vpop.trf.xlu0
      %v1052 = vpop.trf.xlu0
      %v1053 = vpop.trf.xlu0
      %v1054 = vpop.trf.xlu0
      %v1055 = vpop.trf.xlu0
      %v1056 = vpop.trf.xlu0
      %v1057 = vpop.trf.xlu0
      %v1058 = vpop.trf.xlu0
      %v1059 = vpop.trf.xlu0
      %v1060 = vxor.u32 %v658, 2147483648
      %v1061 = vmul.f32 %v1060, 1.442695
      %v1062 = vpow.pop %v1061
      %v1063 = vadd.f32 %v1062, 1.0
      %v1064 = vrcp.pop %v1063
      %v1065 = vmul.f32 1.0, %v1064
      %v1066 = vmul.f32 %v658, %v1065
      %v1067 = vld [vmem:[%s548] sm:$0x1]
      %vm1068 = vcmp.gt.f32.partialorder %v579, 0.0
      %1070 = vset.pattern.permute.xlu0 0
      %1071 = vperm.xlu0 %1070, %v993
      %v1072 = vpop.permute.xlu0 %1071
      %v1074 = vlaneseq
      %v1075 = vshrl.u32 %v1074, 7
      %v1076 = vsub.s32 0, %v1075
      %v1077 = vrot.slane %v1012, %v1076
      %v1078 = vsub.f32 %v1072, %v1077
      %v1079 = vsel %vm1068, %v1078, -inf
      %v1080 = vlaneseq
      %v1081 = vshrl.u32 %v1080, 7
      %v1082 = vsub.s32 0, %v1081
      %v1083 = vrot.slane %v1044, %v1082
      %v1084 = vadd.f32 %v1079, %v1083
      %v1085 = vsel %vm922, %v1084, -inf
      %1086 = vmax.xlane.f32.xlu0 %v1085
      %v1087 = vpop.xlane.xlu0 %1086
      %v1088 = vsub.f32 %v1084, %v1087
      %v1089 = vmul.f32 %v1088, 1.442695
      %v1090 = vpow.pop %v1089
      %v1091 = vpack.c.bf16 %v803, %v803
      %1093 = vrot.lane.b32.xlu0 %v1091, 64
      %v1094 = vpop.permute.xlu0 %1093
      %vm1095 = vcmask 130048
      %v1097 = vsel %vm1095, %v1091, 0
      %v1100 = vsel %vm1095, %v1094, 0
      %1102 = vmatprep.subr.bf16.mxu0 0
      %1103 = vmatpush1.bf16.xpose.msra.mxu0 %v1100
      %1104 = vmatprep.subr.bf16.mxu0 0
      %1105 = vmatpush1.bf16.xpose.msra.mxu0 0
      %1106 = vmatprep.subr.bf16.mxu0 0
      %1107 = vmatpush1.bf16.xpose.msra.mxu0 0
      %1108 = vmatprep.subr.bf16.mxu0 0
      %1109 = vmatpush1.bf16.xpose.msra.mxu0 0
      %1110 = vmatprep.subr.bf16.mxu0 0
      %1111 = vmatpush1.bf16.xpose.msra.mxu0 0
      %1112 = vmatprep.subr.bf16.mxu0 0
      %1113 = vmatpush1.bf16.xpose.msra.mxu0 0
      %1114 = vmatprep.subr.bf16.mxu0 0
      %1115 = vmatpush1.bf16.xpose.msra.mxu0 0
      %1116 = vmatprep.subr.bf16.mxu0 0
      %1117 = vmatpush1.bf16.xpose.msra.mxu0 0
      %1118 = vmatprep.subr.bf16.mxu0 0
      %1119 = vmatpush1.bf16.xpose.msra.mxu0 0
      %1120 = vmatprep.subr.bf16.mxu0 0
      %1121 = vmatpush1.bf16.xpose.msra.mxu0 0
      %1122 = vmatprep.subr.bf16.mxu0 0
      %1123 = vmatpush1.bf16.xpose.msra.mxu0 0
      %1124 = vmatprep.subr.bf16.mxu0 0
      %1125 = vmatpush1.bf16.xpose.msra.mxu0 0
      %1126 = vmatprep.subr.bf16.mxu0 0
      %1127 = vmatpush1.bf16.xpose.msra.mxu0 0
      %1128 = vmatprep.subr.bf16.mxu0 0
      %1129 = vmatpush1.bf16.xpose.msra.mxu0 0
      %1130 = vmatprep.subr.bf16.mxu0 0
      %1131 = vmatpush1.bf16.xpose.msra.mxu0 0
      %1132 = vmatprep.subr.bf16.mxu0 0
      %1133 = vmatpush1.bf16.xpose.msra.mxu0 0
      %1134 = vmatprep.mubr.bf16.mxu0 0
      %1135 = vmatmul.mubr.bf16.gmra.mrb[0].mxu0 %v1097
      %v1136 = vpop.f32.mrb[0].mxu0
      %v1137 = vadd.f32 0.0, %v1136
      %v1138 = vpop.f32.mrb[0].mxu0
      %v1139 = vpop.f32.mrb[0].mxu0
      %v1140 = vpop.f32.mrb[0].mxu0
      %1141 = vdwg.mxu0
      %v1142 = vmul.f32 %v1137, 0.25
      %v1143 = vmul.f32 %v1142, %v1090
      %v1144 = vsel %vm922, %v1143, 0.0
      %1145 = vadd.xlane.f32.xlu0 %v1144
      %v1146 = vpop.xlane.xlu0 %1145
      %v1147 = vand.u32 2147483647, %v1146
      %v1148 = vsub.f32 0.0, %v1087
      %v1149 = vmul.f32 %v1148, 1.442695
      %v1150 = vpow.pop %v1149
      %v1151 = vmax.f32 %v1147, %v1150
      %v1152 = vadd.f32 %v1151, 1e-06
      %v1153 = vrcp.pop %v1152
      %v1154 = vmul.f32 %v1143, %v1153
      %v1155 = vpack.c.bf16 %v1154, %v1154
      %v1156 = vpack.c.bf16 %v880, %v880
      %v1158 = vsel %vm922, %v1155, 0
      %vm1160 = vcmask 1043456
      %v1162 = vsel %vm1160, %v1156, 0
      %1164 = vmatprep.subr.bf16.mxu0 0
      %1165 = vmatpush1.bf16.msra.mxu0 %v1162
      %1166 = vmatprep.subr.bf16.mxu0 0
      %1167 = vmatpush1.bf16.msra.mxu0 0
      %1168 = vmatprep.subr.bf16.mxu0 0
      %1169 = vmatpush1.bf16.msra.mxu0 0
      %1170 = vmatprep.subr.bf16.mxu0 0
      %1171 = vmatpush1.bf16.msra.mxu0 0
      %1172 = vmatprep.subr.bf16.mxu0 0
      %1173 = vmatpush1.bf16.msra.mxu0 0
      %1174 = vmatprep.subr.bf16.mxu0 0
      %1175 = vmatpush1.bf16.msra.mxu0 0
      %1176 = vmatprep.subr.bf16.mxu0 0
      %1177 = vmatpush1.bf16.msra.mxu0 0
      %1178 = vmatprep.subr.bf16.mxu0 0
      %1179 = vmatpush1.bf16.msra.mxu0 0
      %1180 = vmatprep.subr.bf16.mxu0 0
      %1181 = vmatpush1.bf16.msra.mxu0 0
      %1182 = vmatprep.subr.bf16.mxu0 0
      %1183 = vmatpush1.bf16.msra.mxu0 0
      %1184 = vmatprep.subr.bf16.mxu0 0
      %1185 = vmatpush1.bf16.msra.mxu0 0
      %1186 = vmatprep.subr.bf16.mxu0 0
      %1187 = vmatpush1.bf16.msra.mxu0 0
      %1188 = vmatprep.subr.bf16.mxu0 0
      %1189 = vmatpush1.bf16.msra.mxu0 0
      %1190 = vmatprep.subr.bf16.mxu0 0
      %1191 = vmatpush1.bf16.msra.mxu0 0
      %1192 = vmatprep.subr.bf16.mxu0 0
      %1193 = vmatpush1.bf16.msra.mxu0 0
      %1194 = vmatprep.subr.bf16.mxu0 0
      %1195 = vmatpush1.bf16.msra.mxu0 0
      %1196 = vmatprep.mubr.bf16.mxu0 0
      %1197 = vmatmul.mubr.bf16.gmra.mrb[0].mxu0 %v1158
      %v1198 = vpop.f32.mrb[0].mxu0
      %v1199 = vadd.f32 0.0, %v1198
      %v1200 = vpop.f32.mrb[0].mxu0
      %v1201 = vpop.f32.mrb[0].mxu0
      %v1202 = vpop.f32.mrb[0].mxu0
      %1203 = vdwg.mxu0
      %v1204 = vsel %vm1095, %v1199, 0.0
      %1205 = vadd.xlane.f32.xlu0 %v1204
      %v1206 = vpop.xlane.xlu0 %1205
      %v1207 = vrcp.pop 16.0
      %v1208 = vmul.f32 %v1206, %v1207
      %v1209 = vsub.f32 %v1199, %v1208
      %v1210 = vmul.f32 %v1209, %v1209
      %v1211 = vsel %vm1095, %v1210, 0.0
      %1212 = vadd.xlane.f32.xlu0 %v1211
      %v1213 = vpop.xlane.xlu0 %1212
      %v1214 = vmul.f32 %v1213, %v1207
      %v1215 = vadd.f32 %v1214, 1e-05
      %v1216 = vrsqrt.pop %v1215
      %v1217 = vmul.f32 %v1209, %v1216
      %v1219 = vlaneseq
      %v1220 = vshrl.u32 %v1219, 7
      %v1221 = vsub.s32 0, %v1220
      %v1222 = vrot.slane %v1067, %v1221
      %v1224 = vmul.f32 %v1217, %v1222
      %1225 = vset.pattern.permute.xlu0 1
      %1226 = vperm.xlu0 %1225, %v993
      %v1227 = vpop.permute.xlu0 %1226
      %v1229 = vlaneseq
      %v1230 = vshrl.u32 %v1229, 7
      %v1231 = vsub.s32 1, %v1230
      %v1232 = vrot.slane %v1012, %v1231
      %v1233 = vsub.f32 %v1227, %v1232
      %v1234 = vsel %vm1068, %v1233, -inf
      %v1235 = vlaneseq
      %v1236 = vshrl.u32 %v1235, 7
      %v1237 = vsub.s32 1, %v1236
      %v1238 = vrot.slane %v1044, %v1237
      %v1239 = vadd.f32 %v1234, %v1238
      %v1240 = vsel %vm922, %v1239, -inf
      %1241 = vmax.xlane.f32.xlu0 %v1240
      %v1242 = vpop.xlane.xlu0 %1241
      %v1243 = vsub.f32 %v1239, %v1242
      %v1244 = vmul.f32 %v1243, 1.442695
      %v1245 = vpow.pop %v1244
      %1246 = vrot.lane.b32.xlu0 %v1091, 112
      %v1247 = vpop.permute.xlu0 %1246
      %1248 = vrot.lane.b32.xlu0 %v1091, 48
      %v1249 = vpop.permute.xlu0 %1248
      %v1251 = vsel %vm1095, %v1247, 0
      %v1254 = vsel %vm1095, %v1249, 0
      %1256 = vmatprep.subr.bf16.mxu0 0
      %1257 = vmatpush1.bf16.xpose.msra.mxu0 %v1254
      %1258 = vmatprep.subr.bf16.mxu0 0
      %1259 = vmatpush1.bf16.xpose.msra.mxu0 0
      %1260 = vmatprep.subr.bf16.mxu0 0
      %1261 = vmatpush1.bf16.xpose.msra.mxu0 0
      %1262 = vmatprep.subr.bf16.mxu0 0
      %1263 = vmatpush1.bf16.xpose.msra.mxu0 0
      %1264 = vmatprep.subr.bf16.mxu0 0
      %1265 = vmatpush1.bf16.xpose.msra.mxu0 0
      %1266 = vmatprep.subr.bf16.mxu0 0
      %1267 = vmatpush1.bf16.xpose.msra.mxu0 0
      %1268 = vmatprep.subr.bf16.mxu0 0
      %1269 = vmatpush1.bf16.xpose.msra.mxu0 0
      %1270 = vmatprep.subr.bf16.mxu0 0
      %1271 = vmatpush1.bf16.xpose.msra.mxu0 0
      %1272 = vmatprep.subr.bf16.mxu0 0
      %1273 = vmatpush1.bf16.xpose.msra.mxu0 0
      %1274 = vmatprep.subr.bf16.mxu0 0
      %1275 = vmatpush1.bf16.xpose.msra.mxu0 0
      %1276 = vmatprep.subr.bf16.mxu0 0
      %1277 = vmatpush1.bf16.xpose.msra.mxu0 0
      %1278 = vmatprep.subr.bf16.mxu0 0
      %1279 = vmatpush1.bf16.xpose.msra.mxu0 0
      %1280 = vmatprep.subr.bf16.mxu0 0
      %1281 = vmatpush1.bf16.xpose.msra.mxu0 0
      %1282 = vmatprep.subr.bf16.mxu0 0
      %1283 = vmatpush1.bf16.xpose.msra.mxu0 0
      %1284 = vmatprep.subr.bf16.mxu0 0
      %1285 = vmatpush1.bf16.xpose.msra.mxu0 0
      %1286 = vmatprep.subr.bf16.mxu0 0
      %1287 = vmatpush1.bf16.xpose.msra.mxu0 0
      %1288 = vmatprep.mubr.bf16.mxu0 0
      %1289 = vmatmul.mubr.bf16.gmra.mrb[0].mxu0 %v1251
      %v1290 = vpop.f32.mrb[0].mxu0
      %v1291 = vadd.f32 0.0, %v1290
      %v1292 = vpop.f32.mrb[0].mxu0
      %v1293 = vpop.f32.mrb[0].mxu0
      %v1294 = vpop.f32.mrb[0].mxu0
      %1295 = vdwg.mxu0
      %v1296 = vmul.f32 %v1291, 0.25
      %v1297 = vmul.f32 %v1296, %v1245
      %v1298 = vsel %vm922, %v1297, 0.0
      %1299 = vadd.xlane.f32.xlu0 %v1298
      %v1300 = vpop.xlane.xlu0 %1299
      %v1301 = vand.u32 2147483647, %v1300
      %v1302 = vsub.f32 0.0, %v1242
      %v1303 = vmul.f32 %v1302, 1.442695
      %v1304 = vpow.pop %v1303
      %v1305 = vmax.f32 %v1301, %v1304
      %v1306 = vadd.f32 %v1305, 1e-06
      %v1307 = vrcp.pop %v1306
      %v1308 = vmul.f32 %v1297, %v1307
      %v1309 = vpack.c.bf16 %v1308, %v1308
      %1311 = vrot.lane.b32.xlu0 %v1156, 112
      %v1312 = vpop.permute.xlu0 %1311
      %v1314 = vsel %vm922, %v1309, 0
      %v1317 = vsel %vm1160, %v1312, 0
      %1319 = vmatprep.subr.bf16.mxu0 0
      %1320 = vmatpush1.bf16.msra.mxu0 %v1317
      %1321 = vmatprep.subr.bf16.mxu0 0
      %1322 = vmatpush1.bf16.msra.mxu0 0
      %1323 = vmatprep.subr.bf16.mxu0 0
      %1324 = vmatpush1.bf16.msra.mxu0 0
      %1325 = vmatprep.subr.bf16.mxu0 0
      %1326 = vmatpush1.bf16.msra.mxu0 0
      %1327 = vmatprep.subr.bf16.mxu0 0
      %1328 = vmatpush1.bf16.msra.mxu0 0
      %1329 = vmatprep.subr.bf16.mxu0 0
      %1330 = vmatpush1.bf16.msra.mxu0 0
      %1331 = vmatprep.subr.bf16.mxu0 0
      %1332 = vmatpush1.bf16.msra.mxu0 0
      %1333 = vmatprep.subr.bf16.mxu0 0
      %1334 = vmatpush1.bf16.msra.mxu0 0
      %1335 = vmatprep.subr.bf16.mxu0 0
      %1336 = vmatpush1.bf16.msra.mxu0 0
      %1337 = vmatprep.subr.bf16.mxu0 0
      %1338 = vmatpush1.bf16.msra.mxu0 0
      %1339 = vmatprep.subr.bf16.mxu0 0
      %1340 = vmatpush1.bf16.msra.mxu0 0
      %1341 = vmatprep.subr.bf16.mxu0 0
      %1342 = vmatpush1.bf16.msra.mxu0 0
      %1343 = vmatprep.subr.bf16.mxu0 0
      %1344 = vmatpush1.bf16.msra.mxu0 0
      %1345 = vmatprep.subr.bf16.mxu0 0
      %1346 = vmatpush1.bf16.msra.mxu0 0
      %1347 = vmatprep.subr.bf16.mxu0 0
      %1348 = vmatpush1.bf16.msra.mxu0 0
      %1349 = vmatprep.subr.bf16.mxu0 0
      %1350 = vmatpush1.bf16.msra.mxu0 0
      %1351 = vmatprep.mubr.bf16.mxu0 0
      %1352 = vmatmul.mubr.bf16.gmra.mrb[0].mxu0 %v1314
      %v1353 = vpop.f32.mrb[0].mxu0
      %v1354 = vadd.f32 0.0, %v1353
      %v1355 = vpop.f32.mrb[0].mxu0
      %v1356 = vpop.f32.mrb[0].mxu0
      %v1357 = vpop.f32.mrb[0].mxu0
      %1358 = vdwg.mxu0
      %v1359 = vsel %vm1095, %v1354, 0.0
      %1360 = vadd.xlane.f32.xlu0 %v1359
      %v1361 = vpop.xlane.xlu0 %1360
      %v1362 = vmul.f32 %v1361, %v1207
      %v1363 = vsub.f32 %v1354, %v1362
      %v1364 = vmul.f32 %v1363, %v1363
      %v1365 = vsel %vm1095, %v1364, 0.0
      %1366 = vadd.xlane.f32.xlu0 %v1365
      %v1367 = vpop.xlane.xlu0 %1366
      %v1368 = vmul.f32 %v1367, %v1207
      %v1369 = vadd.f32 %v1368, 1e-05
      %v1370 = vrsqrt.pop %v1369
      %v1371 = vmul.f32 %v1363, %v1370
      %1372 = vrot.lane.b32.xlu0 %v1222, 112
      %v1373 = vpop.permute.xlu0 %1372
      %v1375 = vmul.f32 %v1371, %v1373
      %1376 = vset.pattern.permute.xlu0 2
      %1377 = vperm.xlu0 %1376, %v993
      %v1378 = vpop.permute.xlu0 %1377
      %v1380 = vlaneseq
      %v1381 = vshrl.u32 %v1380, 7
      %v1382 = vsub.s32 2, %v1381
      %v1383 = vrot.slane %v1012, %v1382
      %v1384 = vsub.f32 %v1378, %v1383
      %v1385 = vsel %vm1068, %v1384, -inf
      %v1386 = vlaneseq
      %v1387 = vshrl.u32 %v1386, 7
      %v1388 = vsub.s32 2, %v1387
      %v1389 = vrot.slane %v1044, %v1388
      %v1390 = vadd.f32 %v1385, %v1389
      %v1391 = vsel %vm922, %v1390, -inf
      %1392 = vmax.xlane.f32.xlu0 %v1391
      %v1393 = vpop.xlane.xlu0 %1392
      %v1394 = vsub.f32 %v1390, %v1393
      %v1395 = vmul.f32 %v1394, 1.442695
      %v1396 = vpow.pop %v1395
      %1397 = vrot.lane.b32.xlu0 %v1091, 96
      %v1398 = vpop.permute.xlu0 %1397
      %1399 = vrot.lane.b32.xlu0 %v1091, 32
      %v1400 = vpop.permute.xlu0 %1399
      %v1402 = vsel %vm1095, %v1398, 0
      %v1405 = vsel %vm1095, %v1400, 0
      %1407 = vmatprep.subr.bf16.mxu0 0
      %1408 = vmatpush1.bf16.xpose.msra.mxu0 %v1405
      %1409 = vmatprep.subr.bf16.mxu0 0
      %1410 = vmatpush1.bf16.xpose.msra.mxu0 0
      %1411 = vmatprep.subr.bf16.mxu0 0
      %1412 = vmatpush1.bf16.xpose.msra.mxu0 0
      %1413 = vmatprep.subr.bf16.mxu0 0
      %1414 = vmatpush1.bf16.xpose.msra.mxu0 0
      %1415 = vmatprep.subr.bf16.mxu0 0
      %1416 = vmatpush1.bf16.xpose.msra.mxu0 0
      %1417 = vmatprep.subr.bf16.mxu0 0
      %1418 = vmatpush1.bf16.xpose.msra.mxu0 0
      %1419 = vmatprep.subr.bf16.mxu0 0
      %1420 = vmatpush1.bf16.xpose.msra.mxu0 0
      %1421 = vmatprep.subr.bf16.mxu0 0
      %1422 = vmatpush1.bf16.xpose.msra.mxu0 0
      %1423 = vmatprep.subr.bf16.mxu0 0
      %1424 = vmatpush1.bf16.xpose.msra.mxu0 0
      %1425 = vmatprep.subr.bf16.mxu0 0
      %1426 = vmatpush1.bf16.xpose.msra.mxu0 0
      %1427 = vmatprep.subr.bf16.mxu0 0
      %1428 = vmatpush1.bf16.xpose.msra.mxu0 0
      %1429 = vmatprep.subr.bf16.mxu0 0
      %1430 = vmatpush1.bf16.xpose.msra.mxu0 0
      %1431 = vmatprep.subr.bf16.mxu0 0
      %1432 = vmatpush1.bf16.xpose.msra.mxu0 0
      %1433 = vmatprep.subr.bf16.mxu0 0
      %1434 = vmatpush1.bf16.xpose.msra.mxu0 0
      %1435 = vmatprep.subr.bf16.mxu0 0
      %1436 = vmatpush1.bf16.xpose.msra.mxu0 0
      %1437 = vmatprep.subr.bf16.mxu0 0
      %1438 = vmatpush1.bf16.xpose.msra.mxu0 0
      %1439 = vmatprep.mubr.bf16.mxu0 0
      %1440 = vmatmul.mubr.bf16.gmra.mrb[0].mxu0 %v1402
      %v1441 = vpop.f32.mrb[0].mxu0
      %v1442 = vadd.f32 0.0, %v1441
      %v1443 = vpop.f32.mrb[0].mxu0
      %v1444 = vpop.f32.mrb[0].mxu0
      %v1445 = vpop.f32.mrb[0].mxu0
      %1446 = vdwg.mxu0
      %v1447 = vmul.f32 %v1442, 0.25
      %v1448 = vmul.f32 %v1447, %v1396
      %v1449 = vsel %vm922, %v1448, 0.0
      %1450 = vadd.xlane.f32.xlu0 %v1449
      %v1451 = vpop.xlane.xlu0 %1450
      %v1452 = vand.u32 2147483647, %v1451
      %v1453 = vsub.f32 0.0, %v1393
      %v1454 = vmul.f32 %v1453, 1.442695
      %v1455 = vpow.pop %v1454
      %v1456 = vmax.f32 %v1452, %v1455
      %v1457 = vadd.f32 %v1456, 1e-06
      %v1458 = vrcp.pop %v1457
      %v1459 = vmul.f32 %v1448, %v1458
      %v1460 = vpack.c.bf16 %v1459, %v1459
      %1461 = vrot.lane.b32.xlu0 %v1156, 96
      %v1462 = vpop.permute.xlu0 %1461
      %v1464 = vsel %vm922, %v1460, 0
      %v1467 = vsel %vm1160, %v1462, 0
      %1469 = vmatprep.subr.bf16.mxu0 0
      %1470 = vmatpush1.bf16.msra.mxu0 %v1467
      %1471 = vmatprep.subr.bf16.mxu0 0
      %1472 = vmatpush1.bf16.msra.mxu0 0
      %1473 = vmatprep.subr.bf16.mxu0 0
      %1474 = vmatpush1.bf16.msra.mxu0 0
      %1475 = vmatprep.subr.bf16.mxu0 0
      %1476 = vmatpush1.bf16.msra.mxu0 0
      %1477 = vmatprep.subr.bf16.mxu0 0
      %1478 = vmatpush1.bf16.msra.mxu0 0
      %1479 = vmatprep.subr.bf16.mxu0 0
      %1480 = vmatpush1.bf16.msra.mxu0 0
      %1481 = vmatprep.subr.bf16.mxu0 0
      %1482 = vmatpush1.bf16.msra.mxu0 0
      %1483 = vmatprep.subr.bf16.mxu0 0
      %1484 = vmatpush1.bf16.msra.mxu0 0
      %1485 = vmatprep.subr.bf16.mxu0 0
      %1486 = vmatpush1.bf16.msra.mxu0 0
      %1487 = vmatprep.subr.bf16.mxu0 0
      %1488 = vmatpush1.bf16.msra.mxu0 0
      %1489 = vmatprep.subr.bf16.mxu0 0
      %1490 = vmatpush1.bf16.msra.mxu0 0
      %1491 = vmatprep.subr.bf16.mxu0 0
      %1492 = vmatpush1.bf16.msra.mxu0 0
      %1493 = vmatprep.subr.bf16.mxu0 0
      %1494 = vmatpush1.bf16.msra.mxu0 0
      %1495 = vmatprep.subr.bf16.mxu0 0
      %1496 = vmatpush1.bf16.msra.mxu0 0
      %1497 = vmatprep.subr.bf16.mxu0 0
      %1498 = vmatpush1.bf16.msra.mxu0 0
      %1499 = vmatprep.subr.bf16.mxu0 0
      %1500 = vmatpush1.bf16.msra.mxu0 0
      %1501 = vmatprep.mubr.bf16.mxu0 0
      %1502 = vmatmul.mubr.bf16.gmra.mrb[0].mxu0 %v1464
      %v1503 = vpop.f32.mrb[0].mxu0
      %v1504 = vadd.f32 0.0, %v1503
      %v1505 = vpop.f32.mrb[0].mxu0
      %v1506 = vpop.f32.mrb[0].mxu0
      %v1507 = vpop.f32.mrb[0].mxu0
      %1508 = vdwg.mxu0
      %v1509 = vsel %vm1095, %v1504, 0.0
      %1510 = vadd.xlane.f32.xlu0 %v1509
      %v1511 = vpop.xlane.xlu0 %1510
      %v1512 = vmul.f32 %v1511, %v1207
      %v1513 = vsub.f32 %v1504, %v1512
      %v1514 = vmul.f32 %v1513, %v1513
      %v1515 = vsel %vm1095, %v1514, 0.0
      %1516 = vadd.xlane.f32.xlu0 %v1515
      %v1517 = vpop.xlane.xlu0 %1516
      %v1518 = vmul.f32 %v1517, %v1207
      %v1519 = vadd.f32 %v1518, 1e-05
      %v1520 = vrsqrt.pop %v1519
      %v1521 = vmul.f32 %v1513, %v1520
      %1522 = vrot.lane.b32.xlu0 %v1222, 96
      %v1523 = vpop.permute.xlu0 %1522
      %v1525 = vmul.f32 %v1521, %v1523
      %1526 = vset.pattern.permute.xlu0 3
      %1527 = vperm.xlu0 %1526, %v993
      %v1528 = vpop.permute.xlu0 %1527
      %v1530 = vlaneseq
      %v1531 = vshrl.u32 %v1530, 7
      %v1532 = vsub.s32 3, %v1531
      %v1533 = vrot.slane %v1012, %v1532
      %v1534 = vsub.f32 %v1528, %v1533
      %v1535 = vsel %vm1068, %v1534, -inf
      %v1536 = vlaneseq
      %v1537 = vshrl.u32 %v1536, 7
      %v1538 = vsub.s32 3, %v1537
      %v1539 = vrot.slane %v1044, %v1538
      %v1540 = vadd.f32 %v1535, %v1539
      %v1541 = vsel %vm922, %v1540, -inf
      %1542 = vmax.xlane.f32.xlu0 %v1541
      %v1543 = vpop.xlane.xlu0 %1542
      %v1544 = vsub.f32 %v1540, %v1543
      %v1545 = vmul.f32 %v1544, 1.442695
      %v1546 = vpow.pop %v1545
      %1547 = vrot.lane.b32.xlu0 %v1091, 80
      %v1548 = vpop.permute.xlu0 %1547
      %1549 = vrot.lane.b32.xlu0 %v1091, 16
      %v1550 = vpop.permute.xlu0 %1549
      %v1552 = vsel %vm1095, %v1548, 0
      %v1555 = vsel %vm1095, %v1550, 0
      %1557 = vmatprep.subr.bf16.mxu0 0
      %1558 = vmatpush1.bf16.xpose.msra.mxu0 %v1555
      %1559 = vmatprep.subr.bf16.mxu0 0
      %1560 = vmatpush1.bf16.xpose.msra.mxu0 0
      %1561 = vmatprep.subr.bf16.mxu0 0
      %1562 = vmatpush1.bf16.xpose.msra.mxu0 0
      %1563 = vmatprep.subr.bf16.mxu0 0
      %1564 = vmatpush1.bf16.xpose.msra.mxu0 0
      %1565 = vmatprep.subr.bf16.mxu0 0
      %1566 = vmatpush1.bf16.xpose.msra.mxu0 0
      %1567 = vmatprep.subr.bf16.mxu0 0
      %1568 = vmatpush1.bf16.xpose.msra.mxu0 0
      %1569 = vmatprep.subr.bf16.mxu0 0
      %1570 = vmatpush1.bf16.xpose.msra.mxu0 0
      %1571 = vmatprep.subr.bf16.mxu0 0
      %1572 = vmatpush1.bf16.xpose.msra.mxu0 0
      %1573 = vmatprep.subr.bf16.mxu0 0
      %1574 = vmatpush1.bf16.xpose.msra.mxu0 0
      %1575 = vmatprep.subr.bf16.mxu0 0
      %1576 = vmatpush1.bf16.xpose.msra.mxu0 0
      %1577 = vmatprep.subr.bf16.mxu0 0
      %1578 = vmatpush1.bf16.xpose.msra.mxu0 0
      %1579 = vmatprep.subr.bf16.mxu0 0
      %1580 = vmatpush1.bf16.xpose.msra.mxu0 0
      %1581 = vmatprep.subr.bf16.mxu0 0
      %1582 = vmatpush1.bf16.xpose.msra.mxu0 0
      %1583 = vmatprep.subr.bf16.mxu0 0
      %1584 = vmatpush1.bf16.xpose.msra.mxu0 0
      %1585 = vmatprep.subr.bf16.mxu0 0
      %1586 = vmatpush1.bf16.xpose.msra.mxu0 0
      %1587 = vmatprep.subr.bf16.mxu0 0
      %1588 = vmatpush1.bf16.xpose.msra.mxu0 0
      %1589 = vmatprep.mubr.bf16.mxu0 0
      %1590 = vmatmul.mubr.bf16.gmra.mrb[0].mxu0 %v1552
      %v1591 = vpop.f32.mrb[0].mxu0
      %v1592 = vadd.f32 0.0, %v1591
      %v1593 = vpop.f32.mrb[0].mxu0
      %v1594 = vpop.f32.mrb[0].mxu0
      %v1595 = vpop.f32.mrb[0].mxu0
      %1596 = vdwg.mxu0
      %v1597 = vmul.f32 %v1592, 0.25
      %v1598 = vmul.f32 %v1597, %v1546
      %v1599 = vsel %vm922, %v1598, 0.0
      %1600 = vadd.xlane.f32.xlu0 %v1599
      %v1601 = vpop.xlane.xlu0 %1600
      %v1602 = vand.u32 2147483647, %v1601
      %v1603 = vsub.f32 0.0, %v1543
      %v1604 = vmul.f32 %v1603, 1.442695
      %v1605 = vpow.pop %v1604
      %v1606 = vmax.f32 %v1602, %v1605
      %v1607 = vadd.f32 %v1606, 1e-06
      %v1608 = vrcp.pop %v1607
      %v1609 = vmul.f32 %v1598, %v1608
      %v1610 = vpack.c.bf16 %v1609, %v1609
      %1611 = vrot.lane.b32.xlu0 %v1156, 80
      %v1612 = vpop.permute.xlu0 %1611
      %v1614 = vsel %vm922, %v1610, 0
      %v1617 = vsel %vm1160, %v1612, 0
      %1619 = vmatprep.subr.bf16.mxu0 0
      %1620 = vmatpush1.bf16.msra.mxu0 %v1617
      %1621 = vmatprep.subr.bf16.mxu0 0
      %1622 = vmatpush1.bf16.msra.mxu0 0
      %1623 = vmatprep.subr.bf16.mxu0 0
      %1624 = vmatpush1.bf16.msra.mxu0 0
      %1625 = vmatprep.subr.bf16.mxu0 0
      %1626 = vmatpush1.bf16.msra.mxu0 0
      %1627 = vmatprep.subr.bf16.mxu0 0
      %1628 = vmatpush1.bf16.msra.mxu0 0
      %1629 = vmatprep.subr.bf16.mxu0 0
      %1630 = vmatpush1.bf16.msra.mxu0 0
      %1631 = vmatprep.subr.bf16.mxu0 0
      %1632 = vmatpush1.bf16.msra.mxu0 0
      %1633 = vmatprep.subr.bf16.mxu0 0
      %1634 = vmatpush1.bf16.msra.mxu0 0
      %1635 = vmatprep.subr.bf16.mxu0 0
      %1636 = vmatpush1.bf16.msra.mxu0 0
      %1637 = vmatprep.subr.bf16.mxu0 0
      %1638 = vmatpush1.bf16.msra.mxu0 0
      %1639 = vmatprep.subr.bf16.mxu0 0
      %1640 = vmatpush1.bf16.msra.mxu0 0
      %1641 = vmatprep.subr.bf16.mxu0 0
      %1642 = vmatpush1.bf16.msra.mxu0 0
      %1643 = vmatprep.subr.bf16.mxu0 0
      %1644 = vmatpush1.bf16.msra.mxu0 0
      %1645 = vmatprep.subr.bf16.mxu0 0
      %1646 = vmatpush1.bf16.msra.mxu0 0
      %1647 = vmatprep.subr.bf16.mxu0 0
      %1648 = vmatpush1.bf16.msra.mxu0 0
      %1649 = vmatprep.subr.bf16.mxu0 0
      %1650 = vmatpush1.bf16.msra.mxu0 0
      %1651 = vmatprep.mubr.bf16.mxu0 0
      %1652 = vmatmul.mubr.bf16.gmra.mrb[0].mxu0 %v1614
      %v1653 = vpop.f32.mrb[0].mxu0
      %v1654 = vadd.f32 0.0, %v1653
      %v1655 = vpop.f32.mrb[0].mxu0
      %v1656 = vpop.f32.mrb[0].mxu0
      %v1657 = vpop.f32.mrb[0].mxu0
      %1658 = vdwg.mxu0
      %v1659 = vsel %vm1095, %v1654, 0.0
      %1660 = vadd.xlane.f32.xlu0 %v1659
      %v1661 = vpop.xlane.xlu0 %1660
      %v1662 = vmul.f32 %v1661, %v1207
      %v1663 = vsub.f32 %v1654, %v1662
      %v1664 = vmul.f32 %v1663, %v1663
      %v1665 = vsel %vm1095, %v1664, 0.0
      %1666 = vadd.xlane.f32.xlu0 %v1665
      %v1667 = vpop.xlane.xlu0 %1666
      %v1668 = vmul.f32 %v1667, %v1207
      %v1669 = vadd.f32 %v1668, 1e-05
      %v1670 = vrsqrt.pop %v1669
      %v1671 = vmul.f32 %v1663, %v1670
      %1672 = vrot.lane.b32.xlu0 %v1222, 80
      %v1673 = vpop.permute.xlu0 %1672
      %v1675 = vmul.f32 %v1671, %v1673
      %1677 = vrot.lane.b32.xlu0 %v1375, 16
      %v1678 = vpop.permute.xlu0 %1677
      %1681 = vrot.lane.b32.xlu0 %v1525, 32
      %v1682 = vpop.permute.xlu0 %1681
      %1685 = vrot.lane.b32.xlu0 %v1675, 48
      %v1686 = vpop.permute.xlu0 %1685
      %v1688 = vsel %vm1095, %v1224, %v1678
      %v1689 = vsel %vm581, %v1688, %v1682
      %vm1690 = vcmask 392192
      %v1691 = vsel %vm1690, %v1689, %v1686
      %v1692 = vld [vmem:[%s551] sm:$0x1]
      %v1694 = vlaneseq
      %v1695 = vshrl.u32 %v1694, 7
      %v1696 = vsub.s32 0, %v1695
      %v1697 = vrot.slane %v1692, %v1696
      %v1699 = vmul.f32 %v1697, %v714
      %v1700 = vadd.f32 %v1691, %v1699
      %1702 = vrot.lane.b32.xlu0 %v1066, 64
      %v1703 = vpop.permute.xlu0 %1702
      %v1705 = vmul.f32 %v1700, %v1703
      %v1706 = vpack.c.bf16 %v1705, %v1705
      %v1707 = vld [vmem:[%s556] sm:$0xf]
      %v1708 = vld [vmem:[%s556 + $0x4] sm:$0xf]
      %v1709 = vld [vmem:[%s556 + $0x8] sm:$0xf]
      %v1710 = vld [vmem:[%s556 + $0xc] sm:$0xf]
      %v1711 = vld [vmem:[%s556 + $0x10] sm:$0xf]
      %v1712 = vld [vmem:[%s556 + $0x14] sm:$0xf]
      %v1713 = vld [vmem:[%s556 + $0x18] sm:$0xf]
      %v1714 = vld [vmem:[%s556 + $0x1c] sm:$0xf]
      %v1723 = vunpack.c.l.b16 %v1707
      %v1724 = vunpack.c.l.b16 %v1708
      %v1725 = vunpack.c.l.b16 %v1709
      %v1726 = vunpack.c.l.b16 %v1710
      %v1727 = vunpack.c.l.b16 %v1711
      %v1728 = vunpack.c.l.b16 %v1712
      %v1729 = vunpack.c.l.b16 %v1713
      %v1730 = vunpack.c.l.b16 %v1714
      %v1731 = vpack.c.b16 %v1724, %v1723
      %v1732 = vpack.c.b16 %v1726, %v1725
      %v1733 = vpack.c.b16 %v1728, %v1727
      %v1734 = vpack.c.b16 %v1730, %v1729
      %v1740 = vsel %vm764, %v1706, 0
      %1742 = vmatprep.subr.bf16.mxu0 0
      %1743 = vmatpush1.bf16.msra.mxu0 %v1731
      %1744 = vmatprep.subr.bf16.mxu0 0
      %1745 = vmatpush1.bf16.msra.mxu0 %v1732
      %1746 = vmatprep.subr.bf16.mxu0 0
      %1747 = vmatpush1.bf16.msra.mxu0 %v1733
      %1748 = vmatprep.subr.bf16.mxu0 0
      %1749 = vmatpush1.bf16.msra.mxu0 %v1734
      %1750 = vmatprep.subr.bf16.mxu0 0
      %1751 = vmatpush1.bf16.msra.mxu0 0
      %1752 = vmatprep.subr.bf16.mxu0 0
      %1753 = vmatpush1.bf16.msra.mxu0 0
      %1754 = vmatprep.subr.bf16.mxu0 0
      %1755 = vmatpush1.bf16.msra.mxu0 0
      %1756 = vmatprep.subr.bf16.mxu0 0
      %1757 = vmatpush1.bf16.msra.mxu0 0
      %1758 = vmatprep.subr.bf16.mxu0 0
      %1759 = vmatpush1.bf16.msra.mxu0 0
      %1760 = vmatprep.subr.bf16.mxu0 0
      %1761 = vmatpush1.bf16.msra.mxu0 0
      %1762 = vmatprep.subr.bf16.mxu0 0
      %1763 = vmatpush1.bf16.msra.mxu0 0
      %1764 = vmatprep.subr.bf16.mxu0 0
      %1765 = vmatpush1.bf16.msra.mxu0 0
      %1766 = vmatprep.subr.bf16.mxu0 0
      %1767 = vmatpush1.bf16.msra.mxu0 0
      %1768 = vmatprep.subr.bf16.mxu0 0
      %1769 = vmatpush1.bf16.msra.mxu0 0
      %1770 = vmatprep.subr.bf16.mxu0 0
      %1771 = vmatpush1.bf16.msra.mxu0 0
      %1772 = vmatprep.subr.bf16.mxu0 0
      %1773 = vmatpush1.bf16.msra.mxu0 0
      %1774 = vmatprep.mubr.bf16.mxu0 0
      %1775 = vmatmul.mubr.bf16.gmra.mrb[0].mxu0 %v1740
      %v1776 = vpop.f32.mrb[0].mxu0
      %v1777 = vadd.f32 0.0, %v1776
      %v1778 = vpop.f32.mrb[0].mxu0
      %v1779 = vpop.f32.mrb[0].mxu0
      %v1780 = vpop.f32.mrb[0].mxu0
      %1781 = vdwg.mxu0
      %v1782 = vadd.f32 %v578, %v1777
      %1783 = vst.msk [vmem:[#allocation2] sm:$0xff] %vm581, %v1782
      %p1784 = scmp.eq.s32.totalorder %s27, 1
      // Predicated region
      $region69: #{xlstm_lm_forward.2} parent=63 // pred_check
        %p1785 = pneg %p1784
      $region70: #{xlstm_lm_forward.2} parent=63 // pred_check_branch
        %1787 = sbr.rel (%p1785) target = $region72
      $region71: #{xlstm_lm_forward.2} parent=63 // pred_region
        %1788 = vst.msk [vmem:[%s560] sm:$0xff] %vm581, %v1782
      $region72: #{xlstm_lm_forward.2} parent=63 // pred_fallthru
        _
      %p1789 = scmp.lt.s32.totalorder %s26, 1
      %s1790 = scalar_select %p1789, %s26, 1
      %s1791 = smul.addr %s1790, 8
      %s1792 = scalar_lea.vmem %s11, %s1791
      // Predicated region
      $region73: #{xlstm_lm_forward.2} parent=63 // pred_check
        %p1793 = pneg %p338
      $region74: #{xlstm_lm_forward.2} parent=63 // pred_check_branch
        %1795 = sbr.rel (%p1793) target = $region76
      $region75: #{xlstm_lm_forward.2} parent=63 // pred_region
        _
      $region76: #{xlstm_lm_forward.2} parent=63 // pred_fallthru
        _
    $region64: #{xlstm_lm_forward.2} parent=5 // pred_fallthru
      _
    %p1796 = scmp.le.s32.totalorder 2, %s17
    // Predicated region
    $region77: #{xlstm_lm_forward.2} parent=5 // pred_check
      %p1797 = pneg %p1796
    $region78: #{xlstm_lm_forward.2} parent=5 // pred_check_branch
      %1799 = sbr.rel (%p1797) target = $region80
    $region79: #{xlstm_lm_forward.2} parent=5 // pred_region
      %s1800 = ssub.s32 %s17, 2
      // Predicated region
      $region81: #{xlstm_lm_forward.2} parent=79 // pred_check
        %p1801 = pneg %p344
      $region82: #{xlstm_lm_forward.2} parent=79 // pred_check_branch
        %1803 = sbr.rel (%p1801) target = $region84
      $region83: #{xlstm_lm_forward.2} parent=79 // pred_region
        %p1804 = scmp.lt.s32.totalorder %s28, 1
        %s1805 = scalar_select %p1804, %s28, 1
        %s1806 = smul.addr %s1805, 8
        %s1807 = scalar_lea.vmem %s11, %s1806
      $region84: #{xlstm_lm_forward.2} parent=79 // pred_fallthru
        _
    $region80: #{xlstm_lm_forward.2} parent=5 // pred_fallthru
      _
  $region6: #{xlstm_lm_forward.2} parent=0 // loop_footer
    %s21 = sadd.s32 1, %s17
  $region7: #{xlstm_lm_forward.2} parent=0 // loop_footer_branch
    %16 = sbr.rel target = $region3
  $region8: #{xlstm_lm_forward.2} parent=0 // loop_exit
    _

</llo_original>
